<compile_context>
chip_gen: v7x
topology: tpu7x:2x2x1
jax: 0.10.0
libtpu: 0.0.40
codegen_flags: <defaults>
</compile_context>

<pallas_src>
import jax
import jax.numpy as jnp
from jax import lax
from jax.experimental import pallas as pl
from jax.experimental.pallas import tpu as pltpu


def _residual_dwconv_gelu_kernel(x_ref, w_ref, b_ref, o_ref, win_ref):
    # x_ref  : (1, H, W, TC)    input block (one image, one channel tile)
    # w_ref  : (3, 3, TC)       depthwise conv weights for this channel tile
    # b_ref  : (1, TC)          conv bias
    # o_ref  : (1, H, W, TC)    output = GELU(dwconv(x)) + x
    # win_ref: (H+2, W+2, TC)   f32 VMEM scratch: zero-padded conv window
    _, H, W, TC = x_ref.shape
    f32 = jnp.float32

    x = x_ref[0]                                        # (H, W, TC)

    # Zero only the 1-pixel border of the padded window; the interior is
    # overwritten below.  (Re-done every grid step so the kernel stays correct
    # under megacore sharding of the parallel grid axes.)
    win_ref[0:1, :, :] = jnp.zeros((1, W + 2, TC), f32)
    win_ref[H + 1:H + 2, :, :] = jnp.zeros((1, W + 2, TC), f32)
    win_ref[:, 0:1, :] = jnp.zeros((H + 2, 1, TC), f32)
    win_ref[:, W + 1:W + 2, :] = jnp.zeros((H + 2, 1, TC), f32)
    win_ref[1:H + 1, 1:W + 1, :] = x.astype(f32)

    # Hoist weights / bias out of the 9-tap loop (single VMEM load each).
    w = w_ref[...].astype(f32)                          # (3, 3, TC)
    b = b_ref[0].astype(f32)                            # (TC,)

    # Depthwise 3x3 conv as 9 shifted multiply-accumulates on the VPU,
    # f32 accumulation; bias folded into the first tap.  Shifts are along the
    # leading / sublane axes only — the lane (channel) axis stays aligned.
    acc = win_ref[0:H, 0:W, :] * w[0, 0] + b
    for ky in range(3):
        for kx in range(3):
            if ky == 0 and kx == 0:
                continue
            acc = acc + win_ref[ky:ky + H, kx:kx + W, :] * w[ky, kx]

    # Exact GELU (matches torch.nn.GELU(approximate='none')).
    # TODO(synk): on v7x (VALU-bound regime) the tanh-approx GELU would move
    # the nonlinearity to the EUP, if exactness vs torch GELU('none') is
    # negotiable.
    inv_sqrt2 = f32(0.7071067811865476)
    y = 0.5 * acc * (1.0 + lax.erf(acc * inv_sqrt2))

    # Residual add.
    o_ref[0] = (y + x.astype(f32)).astype(o_ref.dtype)


def residual_forward_nhwc(x_nhwc, w_dw, b_dw, *, channel_tile=None):
    """Fused Residual(dwconv3x3 + GELU) forward on an NHWC activation.

    x_nhwc: (N, H, W, C); w_dw: (3, 3, C); b_dw: (C,).
    """
    N, H, W, C = x_nhwc.shape
    if channel_tile is None:
        # Lane-dense (multiple of 128) channel tiles at real ConvMixer widths;
        # fall back to the full (small) channel dim otherwise.
        channel_tile = 128 if C % 128 == 0 else C
    assert C % channel_tile == 0
    tc = channel_tile
    b2 = b_dw.reshape(1, C)

    return pl.pallas_call(
        _residual_dwconv_gelu_kernel,
        out_shape=jax.ShapeDtypeStruct((N, H, W, C), x_nhwc.dtype),
        grid_spec=pltpu.PrefetchScalarGridSpec(
            num_scalar_prefetch=0,
            # Depthwise conv is channel-separable, so the (batch, channel-tile)
            # grid needs no halo: every input element is DMA'd from HBM exactly
            # once, and the grid provides pipeline depth plus >=2 parallel
            # extent for v7x's two TensorCores.
            grid=(N, C // tc),
            in_specs=[
                pl.BlockSpec((1, H, W, tc), lambda n, c: (n, 0, 0, c)),
                pl.BlockSpec((3, 3, tc), lambda n, c: (0, 0, c)),
                pl.BlockSpec((1, tc), lambda n, c: (0, c)),
            ],
            out_specs=pl.BlockSpec((1, H, W, tc), lambda n, c: (n, 0, 0, c)),
            scratch_shapes=[pltpu.VMEM((H + 2, W + 2, tc), jnp.float32)],
        ),
        compiler_params=pltpu.CompilerParams(
            dimension_semantics=("parallel", "parallel"),
            # Double-buffered in/out blocks + the f32 window scratch stay well
            # under this on every generation (v7x physical VMEM is 64 MiB).
            vmem_limit_bytes=32 * 1024 * 1024,
        ),
    )(x_nhwc, w_dw, b2)


def residual_forward(x_nchw, w_dw, b_dw):
    """PyTorch-layout wrapper: (N, C, H, W) -> (N, C, H, W).

    # TODO(synk): inside a ConvMixer stack keep activations NHWC end-to-end and
    # call residual_forward_nhwc directly; the two transposes here are pure
    # layout plumbing for the NCHW PyTorch convention.
    """
    x_nhwc = jnp.transpose(x_nchw, (0, 2, 3, 1))
    out_nhwc = residual_forward_nhwc(x_nhwc, w_dw, b_dw)
    return jnp.transpose(out_nhwc, (0, 3, 1, 2))


def _reference(x_nchw, w_dw, b_dw):
    """Pure-JAX reference: depthwise conv (groups=C, same pad) + GELU + residual."""
    N, C, H, W = x_nchw.shape
    # lax conv wants OIHW for grouped conv: (C_out=C, C_in/groups=1, 3, 3)
    w_oihw = jnp.transpose(w_dw, (2, 0, 1))[:, None, :, :]
    y = lax.conv_general_dilated(
        x_nchw, w_oihw, window_strides=(1, 1), padding="SAME",
        feature_group_count=C,
        dimension_numbers=("NCHW", "OIHW", "NCHW"))
    y = y + b_dw.reshape(1, C, 1, 1)
    y = 0.5 * y * (1.0 + lax.erf(y * jnp.float32(0.7071067811865476)))
    return y + x_nchw


if __name__ == "__main__":
    key = jax.random.PRNGKey(0)
    kx, kw, kb = jax.random.split(key, 3)

    N, C, H, W = 2, 4, 16, 16
    x = jax.random.normal(kx, (N, C, H, W), dtype=jnp.float32)
    # Deterministic synthetic parameters for fn's depthwise conv.
    w_dw = jax.random.normal(kw, (3, 3, C), dtype=jnp.float32) * 0.1
    b_dw = jax.random.normal(kb, (C,), dtype=jnp.float32) * 0.1

    out = jax.block_until_ready(residual_forward(x, w_dw, b_dw))
    ref = jax.block_until_ready(_reference(x, w_dw, b_dw))

    assert out.shape == (N, C, H, W)
    assert jnp.max(jnp.abs(out - ref)) < 1e-4

    print("KERNEL_OK")
</pallas_src>

<mosaic_0001>
module attributes {stable_mosaic.version = 11 : i64} {
  func.func @_residual_dwconv_gelu_kernel(%arg0: i32, %arg1: i32, %arg2: memref<1x16x16x4xf32, #tpu.memory_space<vmem>>, %arg3: memref<3x3x4xf32, #tpu.memory_space<vmem>>, %arg4: memref<1x4xf32, #tpu.memory_space<vmem>>, %arg5: memref<1x16x16x4xf32, #tpu.memory_space<vmem>>, %arg6: memref<18x18x4xf32, #tpu.memory_space<vmem>>) attributes {dimension_semantics = [#tpu.dimension_semantics<parallel>, #tpu.dimension_semantics<parallel>], iteration_bounds = array<i64: 2, 1>, scalar_prefetch = 0 : i64, scratch_operands = 1 : i64, tpu.core_type = #tpu.core_type<tc>, window_params = [{transform_indices = @transform_0, window_bounds = array<i64: 1, 16, 16, 4>}, {transform_indices = @transform_1, window_bounds = array<i64: 3, 3, 4>}, {transform_indices = @transform_2, window_bounds = array<i64: 1, 4>}, {transform_indices = @transform_3, window_bounds = array<i64: 1, 16, 16, 4>}]} {
    %c0 = arith.constant 0 : index
    %c0_0 = arith.constant 0 : index
    %c0_1 = arith.constant 0 : index
    %c0_2 = arith.constant 0 : index
    %0 = vector.load %arg2[%c0, %c0_0, %c0_1, %c0_2] : memref<1x16x16x4xf32, #tpu.memory_space<vmem>>, vector<1x16x16x4xf32>
    %1 = vector.shape_cast %0 : vector<1x16x16x4xf32> to vector<16x16x4xf32>
    %cst = arith.constant 0.000000e+00 : f32
    %2 = vector.broadcast %cst : f32 to vector<1x18x4xf32>
    %c0_3 = arith.constant 0 : index
    %c0_4 = arith.constant 0 : index
    %c0_5 = arith.constant 0 : index
    %3 = vector.load %arg6[%c0_3, %c0_4, %c0_5] : memref<18x18x4xf32, #tpu.memory_space<vmem>>, vector<1x18x4xf32>
    tpu.vector_store %arg6[%c0_3, %c0_4, %c0_5], %2 {strides = array<i32>} : memref<18x18x4xf32, #tpu.memory_space<vmem>>, vector<1x18x4xf32>,
    %cst_6 = arith.constant 0.000000e+00 : f32
    %4 = vector.broadcast %cst_6 : f32 to vector<1x18x4xf32>
    %c17 = arith.constant 17 : index
    %c0_7 = arith.constant 0 : index
    %c0_8 = arith.constant 0 : index
    %5 = vector.load %arg6[%c17, %c0_7, %c0_8] : memref<18x18x4xf32, #tpu.memory_space<vmem>>, vector<1x18x4xf32>
    tpu.vector_store %arg6[%c17, %c0_7, %c0_8], %4 {strides = array<i32>} : memref<18x18x4xf32, #tpu.memory_space<vmem>>, vector<1x18x4xf32>,
    %cst_9 = arith.constant 0.000000e+00 : f32
    %6 = vector.broadcast %cst_9 : f32 to vector<18x1x4xf32>
    %c0_10 = arith.constant 0 : index
    %c0_11 = arith.constant 0 : index
    %c0_12 = arith.constant 0 : index
    %7 = vector.load %arg6[%c0_10, %c0_11, %c0_12] : memref<18x18x4xf32, #tpu.memory_space<vmem>>, vector<18x1x4xf32>
    tpu.vector_store %arg6[%c0_10, %c0_11, %c0_12], %6 {strides = array<i32>} : memref<18x18x4xf32, #tpu.memory_space<vmem>>, vector<18x1x4xf32>,
    %cst_13 = arith.constant 0.000000e+00 : f32
    %8 = vector.broadcast %cst_13 : f32 to vector<18x1x4xf32>
    %c0_14 = arith.constant 0 : index
    %c17_15 = arith.constant 17 : index
    %c0_16 = arith.constant 0 : index
    %9 = vector.load %arg6[%c0_14, %c17_15, %c0_16] : memref<18x18x4xf32, #tpu.memory_space<vmem>>, vector<18x1x4xf32>
    tpu.vector_store %arg6[%c0_14, %c17_15, %c0_16], %8 {strides = array<i32>} : memref<18x18x4xf32, #tpu.memory_space<vmem>>, vector<18x1x4xf32>,
    %c1 = arith.constant 1 : index
    %c1_17 = arith.constant 1 : index
    %c0_18 = arith.constant 0 : index
    %10 = vector.load %arg6[%c1, %c1_17, %c0_18] : memref<18x18x4xf32, #tpu.memory_space<vmem>>, vector<16x16x4xf32>
    tpu.vector_store %arg6[%c1, %c1_17, %c0_18], %1 {strides = array<i32>} : memref<18x18x4xf32, #tpu.memory_space<vmem>>, vector<16x16x4xf32>,
    %c0_19 = arith.constant 0 : index
    %c0_20 = arith.constant 0 : index
    %c0_21 = arith.constant 0 : index
    %11 = vector.load %arg3[%c0_19, %c0_20, %c0_21] : memref<3x3x4xf32, #tpu.memory_space<vmem>>, vector<3x3x4xf32>
    %c0_22 = arith.constant 0 : index
    %c0_23 = arith.constant 0 : index
    %12 = vector.load %arg4[%c0_22, %c0_23] : memref<1x4xf32, #tpu.memory_space<vmem>>, vector<1x4xf32>
    %13 = vector.shape_cast %12 : vector<1x4xf32> to vector<4xf32>
    %c0_24 = arith.constant 0 : index
    %c0_25 = arith.constant 0 : index
    %c0_26 = arith.constant 0 : index
    %14 = vector.load %arg6[%c0_24, %c0_25, %c0_26] : memref<18x18x4xf32, #tpu.memory_space<vmem>>, vector<16x16x4xf32>
    %15 = vector.extract_strided_slice %11 {offsets = [0, 0, 0], sizes = [1, 1, 4], strides = [1, 1, 1]} : vector<3x3x4xf32> to vector<1x1x4xf32>
    %16 = vector.shape_cast %15 : vector<1x1x4xf32> to vector<4xf32>
    %17 = vector.shape_cast %16 : vector<4xf32> to vector<1x1x4xf32>
    %18 = vector.broadcast %17 : vector<1x1x4xf32> to vector<16x16x4xf32>
    %19 = arith.mulf %14, %18 : vector<16x16x4xf32>
    %20 = vector.shape_cast %13 : vector<4xf32> to vector<1x1x4xf32>
    %21 = vector.broadcast %20 : vector<1x1x4xf32> to vector<16x16x4xf32>
    %22 = arith.addf %19, %21 : vector<16x16x4xf32>
    %c0_27 = arith.constant 0 : index
    %c1_28 = arith.constant 1 : index
    %c0_29 = arith.constant 0 : index
    %23 = vector.load %arg6[%c0_27, %c1_28, %c0_29] : memref<18x18x4xf32, #tpu.memory_space<vmem>>, vector<16x16x4xf32>
    %24 = vector.extract_strided_slice %11 {offsets = [0, 1, 0], sizes = [1, 1, 4], strides = [1, 1, 1]} : vector<3x3x4xf32> to vector<1x1x4xf32>
    %25 = vector.shape_cast %24 : vector<1x1x4xf32> to vector<4xf32>
    %26 = vector.shape_cast %25 : vector<4xf32> to vector<1x1x4xf32>
    %27 = vector.broadcast %26 : vector<1x1x4xf32> to vector<16x16x4xf32>
    %28 = arith.mulf %23, %27 : vector<16x16x4xf32>
    %29 = arith.addf %22, %28 : vector<16x16x4xf32>
    %c0_30 = arith.constant 0 : index
    %c2 = arith.constant 2 : index
    %c0_31 = arith.constant 0 : index
    %30 = vector.load %arg6[%c0_30, %c2, %c0_31] : memref<18x18x4xf32, #tpu.memory_space<vmem>>, vector<16x16x4xf32>
    %31 = vector.extract_strided_slice %11 {offsets = [0, 2, 0], sizes = [1, 1, 4], strides = [1, 1, 1]} : vector<3x3x4xf32> to vector<1x1x4xf32>
    %32 = vector.shape_cast %31 : vector<1x1x4xf32> to vector<4xf32>
    %33 = vector.shape_cast %32 : vector<4xf32> to vector<1x1x4xf32>
    %34 = vector.broadcast %33 : vector<1x1x4xf32> to vector<16x16x4xf32>
    %35 = arith.mulf %30, %34 : vector<16x16x4xf32>
    %36 = arith.addf %29, %35 : vector<16x16x4xf32>
    %c1_32 = arith.constant 1 : index
    %c0_33 = arith.constant 0 : index
    %c0_34 = arith.constant 0 : index
    %37 = vector.load %arg6[%c1_32, %c0_33, %c0_34] : memref<18x18x4xf32, #tpu.memory_space<vmem>>, vector<16x16x4xf32>
    %38 = vector.extract_strided_slice %11 {offsets = [1, 0, 0], sizes = [1, 1, 4], strides = [1, 1, 1]} : vector<3x3x4xf32> to vector<1x1x4xf32>
    %39 = vector.shape_cast %38 : vector<1x1x4xf32> to vector<4xf32>
    %40 = vector.shape_cast %39 : vector<4xf32> to vector<1x1x4xf32>
    %41 = vector.broadcast %40 : vector<1x1x4xf32> to vector<16x16x4xf32>
    %42 = arith.mulf %37, %41 : vector<16x16x4xf32>
    %43 = arith.addf %36, %42 : vector<16x16x4xf32>
    %c1_35 = arith.constant 1 : index
    %c1_36 = arith.constant 1 : index
    %c0_37 = arith.constant 0 : index
    %44 = vector.load %arg6[%c1_35, %c1_36, %c0_37] : memref<18x18x4xf32, #tpu.memory_space<vmem>>, vector<16x16x4xf32>
    %45 = vector.extract_strided_slice %11 {offsets = [1, 1, 0], sizes = [1, 1, 4], strides = [1, 1, 1]} : vector<3x3x4xf32> to vector<1x1x4xf32>
    %46 = vector.shape_cast %45 : vector<1x1x4xf32> to vector<4xf32>
    %47 = vector.shape_cast %46 : vector<4xf32> to vector<1x1x4xf32>
    %48 = vector.broadcast %47 : vector<1x1x4xf32> to vector<16x16x4xf32>
    %49 = arith.mulf %44, %48 : vector<16x16x4xf32>
    %50 = arith.addf %43, %49 : vector<16x16x4xf32>
    %c1_38 = arith.constant 1 : index
    %c2_39 = arith.constant 2 : index
    %c0_40 = arith.constant 0 : index
    %51 = vector.load %arg6[%c1_38, %c2_39, %c0_40] : memref<18x18x4xf32, #tpu.memory_space<vmem>>, vector<16x16x4xf32>
    %52 = vector.extract_strided_slice %11 {offsets = [1, 2, 0], sizes = [1, 1, 4], strides = [1, 1, 1]} : vector<3x3x4xf32> to vector<1x1x4xf32>
    %53 = vector.shape_cast %52 : vector<1x1x4xf32> to vector<4xf32>
    %54 = vector.shape_cast %53 : vector<4xf32> to vector<1x1x4xf32>
    %55 = vector.broadcast %54 : vector<1x1x4xf32> to vector<16x16x4xf32>
    %56 = arith.mulf %51, %55 : vector<16x16x4xf32>
    %57 = arith.addf %50, %56 : vector<16x16x4xf32>
    %c2_41 = arith.constant 2 : index
    %c0_42 = arith.constant 0 : index
    %c0_43 = arith.constant 0 : index
    %58 = vector.load %arg6[%c2_41, %c0_42, %c0_43] : memref<18x18x4xf32, #tpu.memory_space<vmem>>, vector<16x16x4xf32>
    %59 = vector.extract_strided_slice %11 {offsets = [2, 0, 0], sizes = [1, 1, 4], strides = [1, 1, 1]} : vector<3x3x4xf32> to vector<1x1x4xf32>
    %60 = vector.shape_cast %59 : vector<1x1x4xf32> to vector<4xf32>
    %61 = vector.shape_cast %60 : vector<4xf32> to vector<1x1x4xf32>
    %62 = vector.broadcast %61 : vector<1x1x4xf32> to vector<16x16x4xf32>
    %63 = arith.mulf %58, %62 : vector<16x16x4xf32>
    %64 = arith.addf %57, %63 : vector<16x16x4xf32>
    %c2_44 = arith.constant 2 : index
    %c1_45 = arith.constant 1 : index
    %c0_46 = arith.constant 0 : index
    %65 = vector.load %arg6[%c2_44, %c1_45, %c0_46] : memref<18x18x4xf32, #tpu.memory_space<vmem>>, vector<16x16x4xf32>
    %66 = vector.extract_strided_slice %11 {offsets = [2, 1, 0], sizes = [1, 1, 4], strides = [1, 1, 1]} : vector<3x3x4xf32> to vector<1x1x4xf32>
    %67 = vector.shape_cast %66 : vector<1x1x4xf32> to vector<4xf32>
    %68 = vector.shape_cast %67 : vector<4xf32> to vector<1x1x4xf32>
    %69 = vector.broadcast %68 : vector<1x1x4xf32> to vector<16x16x4xf32>
    %70 = arith.mulf %65, %69 : vector<16x16x4xf32>
    %71 = arith.addf %64, %70 : vector<16x16x4xf32>
    %c2_47 = arith.constant 2 : index
    %c2_48 = arith.constant 2 : index
    %c0_49 = arith.constant 0 : index
    %72 = vector.load %arg6[%c2_47, %c2_48, %c0_49] : memref<18x18x4xf32, #tpu.memory_space<vmem>>, vector<16x16x4xf32>
    %73 = vector.extract_strided_slice %11 {offsets = [2, 2, 0], sizes = [1, 1, 4], strides = [1, 1, 1]} : vector<3x3x4xf32> to vector<1x1x4xf32>
    %74 = vector.shape_cast %73 : vector<1x1x4xf32> to vector<4xf32>
    %75 = vector.shape_cast %74 : vector<4xf32> to vector<1x1x4xf32>
    %76 = vector.broadcast %75 : vector<1x1x4xf32> to vector<16x16x4xf32>
    %77 = arith.mulf %72, %76 : vector<16x16x4xf32>
    %78 = arith.addf %71, %77 : vector<16x16x4xf32>
    %cst_50 = arith.constant 5.000000e-01 : f32
    %79 = vector.broadcast %cst_50 : f32 to vector<16x16x4xf32>
    %80 = arith.mulf %79, %78 : vector<16x16x4xf32>
    %cst_51 = arith.constant 0.707106769 : f32
    %81 = vector.broadcast %cst_51 : f32 to vector<16x16x4xf32>
    %82 = arith.mulf %78, %81 : vector<16x16x4xf32>
    %83 = math.erf %82 : vector<16x16x4xf32>
    %cst_52 = arith.constant 1.000000e+00 : f32
    %84 = vector.broadcast %cst_52 : f32 to vector<16x16x4xf32>
    %85 = arith.addf %84, %83 : vector<16x16x4xf32>
    %86 = arith.mulf %80, %85 : vector<16x16x4xf32>
    %87 = arith.addf %86, %1 : vector<16x16x4xf32>
    %c0_53 = arith.constant 0 : index
    %c0_54 = arith.constant 0 : index
    %c0_55 = arith.constant 0 : index
    %c0_56 = arith.constant 0 : index
    %88 = vector.load %arg5[%c0_53, %c0_54, %c0_55, %c0_56] : memref<1x16x16x4xf32, #tpu.memory_space<vmem>>, vector<1x16x16x4xf32>
    %89 = vector.shape_cast %88 : vector<1x16x16x4xf32> to vector<16x16x4xf32>
    %90 = vector.shape_cast %87 : vector<16x16x4xf32> to vector<1x16x16x4xf32>
    tpu.vector_store %arg5[%c0_53, %c0_54, %c0_55, %c0_56], %90 {strides = array<i32>} : memref<1x16x16x4xf32, #tpu.memory_space<vmem>>, vector<1x16x16x4xf32>,
    return
  }
  func.func @transform_0(%arg0: i32, %arg1: i32) -> (i32, i32, i32, i32) {
    %c0_i32 = arith.constant 0 : i32
    %c0_i32_0 = arith.constant 0 : i32
    %c0_i32_1 = arith.constant 0 : i32
    return %arg0, %c0_i32, %c0_i32_0, %arg1 : i32, i32, i32, i32
  }
  func.func @transform_1(%arg0: i32, %arg1: i32) -> (i32, i32, i32) {
    %c0_i32 = arith.constant 0 : i32
    %c0_i32_0 = arith.constant 0 : i32
    %c0_i32_1 = arith.constant 0 : i32
    return %c0_i32, %c0_i32_0, %arg1 : i32, i32, i32
  }
  func.func @transform_2(%arg0: i32, %arg1: i32) -> (i32, i32) {
    %c0_i32 = arith.constant 0 : i32
    %c0_i32_0 = arith.constant 0 : i32
    return %c0_i32, %arg1 : i32, i32
  }
  func.func @transform_3(%arg0: i32, %arg1: i32) -> (i32, i32, i32, i32) {
    %c0_i32 = arith.constant 0 : i32
    %c0_i32_0 = arith.constant 0 : i32
    %c0_i32_1 = arith.constant 0 : i32
    return %arg0, %c0_i32, %c0_i32_0, %arg1 : i32, i32, i32, i32
  }
}

</mosaic_0001>

<llo_original>
// kernel: tpu_custom_call.1
$region0: #{tpu_custom_call.1}
  #allocation0 [shape = 'u32[]', space=smem, size = 0x4, offset = 0x4, fixed_abs, tag = 'smem constant byte address 0x4 - core index']
  #allocation1 [shape = 'u32[144,128]{1,0:T(1,128)}', space=vmem, size = 0x12000, scoped, tag = 'internal scratch']
  #allocation2 [shape = 'f32[18,18,4]{2,1,0:T(8,128)}', space=vmem, size = 0x36000, scoped, tag = 'scratch operand']
  %s0 = inlined_call_operand.vmem [shape: f32[2,16,16,4], index: 0, kind: input, shape index: {}]
  %s1 = inlined_call_operand.vmem [shape: f32[3,3,4], index: 1, kind: input, shape index: {}]
  %s2 = inlined_call_operand.vmem [shape: f32[1,4], index: 2, kind: input, shape index: {}]
  %s3 = inlined_call_operand.vmem [shape: f32[2,16,16,4], index: 3, kind: output, shape index: {}]
  %s4 = sld [smem:[#allocation0]]
  $region45: #{tpu_custom_call.1} parent=0
    _
  %s6 = ssub.s32 1, %s4
  %s7 = scalar_select 0, %s6, %s4
  loop: start=0, step=1, limit=4
  $region2: #{tpu_custom_call.1} parent=0 // loop_pre_header
    _
  $region3: #{tpu_custom_call.1} parent=0 // loop_header
    %s9 = sphi 0, %s13
    %p10 = scmp.ge.s32.totalorder %s9, 4
    %s16 = sphi 0, %s28
    %s17 = sphi 0, %s24
    %s18 = sphi 0, %s16
    %s19 = sphi 0, %s17
    %s20 = sphi 0, %s18
    %s21 = sphi 0, %s19
    %s33 = sphi 0, %s35
    %s36 = sphi 0, %s33
    %s37 = sphi 0, %s36
    %s53 = sphi 0, %s37
    %s59 = sphi 0, %s61
    %s62 = sphi 0, %s59
    %s63 = sphi 0, %s62
    %s79 = sphi 0, %s63
    %s85 = sphi 0, %s87
    %s88 = sphi 0, %s85
    %s89 = sphi 0, %s88
    %s105 = sphi 0, %s89
    %s113 = sphi 0, %s115
    %s116 = sphi 0, %s113
    %s117 = sphi 0, %s116
    %s133 = sphi 0, %s117
  $region4: #{tpu_custom_call.1} parent=0 // loop_header_branch
    %12 = sbr.rel (%p10) target = $region8
  $region5: #{tpu_custom_call.1} parent=0 // loop_body
    %s14 = ssub.s32 %s9, 1
    %s15 = ssub.s32 %s9, 2
    %s22 = sadd.s32 1, %s17
    %p23 = scmp.ge.s32.totalorder %s22, 1
    %s24 = scalar_select %p23, 0, %s22
    %s25 = sadd.s32 1, %s16
    %s26 = scalar_select %p23, %s25, %s16
    %p27 = scmp.ge.s32.totalorder %s26, 2
    %s28 = scalar_select %p27, 0, %s26
    %s29 = ssub.s32 %s16, %s28
    %s30 = ssub.s32 %s17, %s24
    %s31 = sor.u32 %s29, %s30
    %p32 = scmp.eq.s32.totalorder %s31, 0
    %s34 = sadd.s32 %s33, 1
    %s35 = scalar_select %p32, %s33, %s34
    %p38 = pneg %p32
    %p39 = scmp.eq.s32.totalorder %s9, 1
    %p40 = por %p38, %p39
    %p41 = scmp.ne.s32.totalorder %s33, %s36
    %p42 = scmp.eq.s32.totalorder %s9, 0
    %p43 = por %p41, %p42
    %p44 = scmp.ne.s32.totalorder %s33, %s36
    %p45 = scmp.eq.s32.totalorder %s14, 1
    %p46 = por %p44, %p45
    %p47 = scmp.ne.s32.totalorder %s36, %s37
    %p48 = scmp.eq.s32.totalorder %s14, 0
    %p49 = por %p47, %p48
    %p50 = scmp.ne.s32.totalorder %s36, %s37
    %p51 = scmp.eq.s32.totalorder %s15, 1
    %p52 = por %p50, %p51
    %p54 = scmp.ne.s32.totalorder %s37, %s53
    %p55 = scmp.eq.s32.totalorder %s15, 0
    %p56 = por %p54, %p55
    %s57 = ssub.s32 %s17, %s24
    %p58 = scmp.eq.s32.totalorder %s57, 0
    %s60 = sadd.s32 %s59, 1
    %s61 = scalar_select %p58, %s59, %s60
    %p64 = pneg %p58
    %p65 = scmp.eq.s32.totalorder %s9, 1
    %p66 = por %p64, %p65
    %p67 = scmp.ne.s32.totalorder %s59, %s62
    %p68 = scmp.eq.s32.totalorder %s9, 0
    %p69 = por %p67, %p68
    %p70 = scmp.ne.s32.totalorder %s59, %s62
    %p71 = scmp.eq.s32.totalorder %s14, 1
    %p72 = por %p70, %p71
    %p73 = scmp.ne.s32.totalorder %s62, %s63
    %p74 = scmp.eq.s32.totalorder %s14, 0
    %p75 = por %p73, %p74
    %p76 = scmp.ne.s32.totalorder %s62, %s63
    %p77 = scmp.eq.s32.totalorder %s15, 1
    %p78 = por %p76, %p77
    %p80 = scmp.ne.s32.totalorder %s63, %s79
    %p81 = scmp.eq.s32.totalorder %s15, 0
    %p82 = por %p80, %p81
    %s83 = ssub.s32 %s17, %s24
    %p84 = scmp.eq.s32.totalorder %s83, 0
    %s86 = sadd.s32 %s85, 1
    %s87 = scalar_select %p84, %s85, %s86
    %p90 = pneg %p84
    %p91 = scmp.eq.s32.totalorder %s9, 1
    %p92 = por %p90, %p91
    %p93 = scmp.ne.s32.totalorder %s85, %s88
    %p94 = scmp.eq.s32.totalorder %s9, 0
    %p95 = por %p93, %p94
    %p96 = scmp.ne.s32.totalorder %s85, %s88
    %p97 = scmp.eq.s32.totalorder %s14, 1
    %p98 = por %p96, %p97
    %p99 = scmp.ne.s32.totalorder %s88, %s89
    %p100 = scmp.eq.s32.totalorder %s14, 0
    %p101 = por %p99, %p100
    %p102 = scmp.ne.s32.totalorder %s88, %s89
    %p103 = scmp.eq.s32.totalorder %s15, 1
    %p104 = por %p102, %p103
    %p106 = scmp.ne.s32.totalorder %s89, %s105
    %p107 = scmp.eq.s32.totalorder %s15, 0
    %p108 = por %p106, %p107
    %s109 = ssub.s32 %s16, %s28
    %s110 = ssub.s32 %s17, %s24
    %s111 = sor.u32 %s109, %s110
    %p112 = scmp.eq.s32.totalorder %s111, 0
    %s114 = sadd.s32 %s113, 1
    %s115 = scalar_select %p112, %s113, %s114
    %p118 = pneg %p112
    %p119 = scmp.eq.s32.totalorder %s9, 1
    %p120 = por %p118, %p119
    %p121 = scmp.ne.s32.totalorder %s113, %s116
    %p122 = scmp.eq.s32.totalorder %s9, 0
    %p123 = por %p121, %p122
    %p124 = scmp.ne.s32.totalorder %s113, %s116
    %p125 = scmp.eq.s32.totalorder %s14, 1
    %p126 = por %p124, %p125
    %p127 = scmp.ne.s32.totalorder %s116, %s117
    %p128 = scmp.eq.s32.totalorder %s14, 0
    %p129 = por %p127, %p128
    %p130 = scmp.ne.s32.totalorder %s116, %s117
    %p131 = scmp.eq.s32.totalorder %s15, 1
    %p132 = por %p130, %p131
    %p134 = scmp.ne.s32.totalorder %s117, %s133
    %p135 = scmp.eq.s32.totalorder %s15, 0
    %p136 = por %p134, %p135
    %p137 = scmp.le.s32.totalorder 1, %s9
    %p138 = scmp.lt.s32.totalorder %s9, 3
    %p139 = pnand %p137, %p138
    %p140 = pneg %p139
    // Predicated region
    $region9: #{tpu_custom_call.1} parent=5 // pred_check
      _
    $region10: #{tpu_custom_call.1} parent=5 // pred_check_branch
      %142 = sbr.rel (%p139) target = $region12
    $region11: #{tpu_custom_call.1} parent=5 // pred_region
      %s143 = ssub.s32 %s9, 1
      // Predicated region
      $region13: #{tpu_custom_call.1} parent=11 // pred_check
        %p144 = pneg %p75
      $region14: #{tpu_custom_call.1} parent=11 // pred_check_branch
        %146 = sbr.rel (%p144) target = $region16
      $region15: #{tpu_custom_call.1} parent=11 // pred_region
        %p147 = scmp.lt.s32.totalorder %s19, 0
        %s148 = scalar_select %p147, %s19, 0
        %s149 = smul.addr %s148, 4
        %s150 = scalar_lea.vmem %s1, %s149
      $region16: #{tpu_custom_call.1} parent=11 // pred_fallthru
        _
      // Predicated region
      $region17: #{tpu_custom_call.1} parent=11 // pred_check
        %p151 = pneg %p101
      $region18: #{tpu_custom_call.1} parent=11 // pred_check_branch
        %153 = sbr.rel (%p151) target = $region20
      $region19: #{tpu_custom_call.1} parent=11 // pred_region
        %p154 = scmp.lt.s32.totalorder %s19, 0
        %s155 = scalar_select %p154, %s19, 0
        %s156 = scalar_lea.vmem %s2, %s155
      $region20: #{tpu_custom_call.1} parent=11 // pred_fallthru
        _
    $region12: #{tpu_custom_call.1} parent=5 // pred_fallthru
      _
    %p157 = scmp.lt.s32.totalorder %s9, 2
    // Predicated region
    $region21: #{tpu_custom_call.1} parent=5 // pred_check
      %p158 = pneg %p157
    $region22: #{tpu_custom_call.1} parent=5 // pred_check_branch
      %160 = sbr.rel (%p158) target = $region24
    $region23: #{tpu_custom_call.1} parent=5 // pred_region
      // Predicated region
      $region25: #{tpu_custom_call.1} parent=23 // pred_check
        %p161 = pneg %p43
      $region26: #{tpu_custom_call.1} parent=23 // pred_check_branch
        %163 = sbr.rel (%p161) target = $region28
      $region27: #{tpu_custom_call.1} parent=23 // pred_region
        %p164 = scmp.lt.s32.totalorder %s16, 1
        %s165 = scalar_select %p164, %s16, 1
        %p166 = scmp.lt.s32.totalorder %s17, 0
        %s167 = scalar_select %p166, %s17, 0
        %s168 = smul.addr %s165, 32
        %s169 = sadd.s32 %s167, %s168
        %s170 = smul.addr %s169, 8
        %s171 = scalar_lea.vmem %s0, %s170
      $region28: #{tpu_custom_call.1} parent=23 // pred_fallthru
        _
    $region24: #{tpu_custom_call.1} parent=5 // pred_fallthru
      _
    %p172 = scmp.le.s32.totalorder 1, %s9
    %p173 = scmp.lt.s32.totalorder %s9, 3
    %p174 = pnand %p172, %p173
    %p175 = pneg %p174
    // Predicated region
    $region29: #{tpu_custom_call.1} parent=5 // pred_check
      _
    $region30: #{tpu_custom_call.1} parent=5 // pred_check_branch
      %177 = sbr.rel (%p174) target = $region32
    $region31: #{tpu_custom_call.1} parent=5 // pred_region
      %s178 = ssub.s32 %s9, 1
      %p179 = scmp.lt.s32.totalorder %s18, 1
      %s180 = scalar_select %p179, %s18, 1
      %p181 = scmp.lt.s32.totalorder %s19, 0
      %s182 = scalar_select %p181, %s19, 0
      %s183 = smul.addr %s180, 32
      %s184 = sadd.s32 %s182, %s183
      %s185 = smul.addr %s184, 8
      %s186 = scalar_lea.vmem %s0, %s185
      %p187 = pneg %p49
      %p188 = pneg %p46
      %p189 = scmp.lt.s32.totalorder %s19, 0
      %s190 = scalar_select %p189, %s19, 0
      %s191 = smul.addr %s190, 4
      %s192 = scalar_lea.vmem %s1, %s191
      %p193 = pneg %p75
      %p194 = pneg %p72
      %p195 = scmp.lt.s32.totalorder %s19, 0
      %s196 = scalar_select %p195, %s19, 0
      %s197 = scalar_lea.vmem %s2, %s196
      %p198 = pneg %p101
      %p199 = pneg %p98
      %p200 = pneg %p129
      %p201 = pneg %p126
      %p202 = scmp.lt.s32.totalorder %s18, 1
      %s203 = scalar_select %p202, %s18, 1
      %p204 = scmp.lt.s32.totalorder %s19, 0
      %s205 = scalar_select %p204, %s19, 0
      %s206 = smul.addr %s203, 32
      %s207 = sadd.s32 %s205, %s206
      %s208 = smul.addr %s207, 8
      %s209 = scalar_lea.vmem %s3, %s208
      %p210 = scmp.lt.s32.totalorder %s18, 1
      %s211 = scalar_select %p210, %s18, 1
      %p212 = scmp.lt.s32.totalorder %s19, 0
      %s213 = scalar_select %p212, %s19, 0
      %s214 = smul.addr %s211, 32
      %s215 = sadd.s32 %s213, %s214
      %s216 = smul.addr %s215, 8
      %s217 = scalar_lea.vmem %s0, %s216
      %p218 = scmp.lt.s32.totalorder %s19, 0
      %s219 = scalar_select %p218, %s19, 0
      %s220 = smul.addr %s219, 4
      %s221 = scalar_lea.vmem %s1, %s220
      %p222 = scmp.lt.s32.totalorder %s19, 0
      %s223 = scalar_select %p222, %s19, 0
      %s224 = scalar_lea.vmem %s2, %s223
      %p225 = scmp.lt.s32.totalorder %s18, 1
      %s226 = scalar_select %p225, %s18, 1
      %p227 = scmp.lt.s32.totalorder %s19, 0
      %s228 = scalar_select %p227, %s19, 0
      %s229 = smul.addr %s226, 32
      %s230 = sadd.s32 %s228, %s229
      %s231 = smul.addr %s230, 8
      %s232 = scalar_lea.vmem %s3, %s231
      %v233 = vld [vmem:[%s217] sm:$0xff]
      %v234 = vld [vmem:[%s217 + $0x8] sm:$0xff]
      %v235 = vld [vmem:[%s217 + $0x10] sm:$0xff]
      %v236 = vld [vmem:[%s217 + $0x18] sm:$0xff]
      %v237 = vld [vmem:[%s217 + $0x20] sm:$0xff]
      %v238 = vld [vmem:[%s217 + $0x28] sm:$0xff]
      %v239 = vld [vmem:[%s217 + $0x30] sm:$0xff]
      %v240 = vld [vmem:[%s217 + $0x38] sm:$0xff]
      %v241 = vld [vmem:[%s217 + $0x40] sm:$0xff]
      %v242 = vld [vmem:[%s217 + $0x48] sm:$0xff]
      %v243 = vld [vmem:[%s217 + $0x50] sm:$0xff]
      %v244 = vld [vmem:[%s217 + $0x58] sm:$0xff]
      %v245 = vld [vmem:[%s217 + $0x60] sm:$0xff]
      %v246 = vld [vmem:[%s217 + $0x68] sm:$0xff]
      %v247 = vld [vmem:[%s217 + $0x70] sm:$0xff]
      %v248 = vld [vmem:[%s217 + $0x78] sm:$0xff]
      %v249 = vld [vmem:[%s217 + $0x80] sm:$0xff]
      %v250 = vld [vmem:[%s217 + $0x88] sm:$0xff]
      %v251 = vld [vmem:[%s217 + $0x90] sm:$0xff]
      %v252 = vld [vmem:[%s217 + $0x98] sm:$0xff]
      %v253 = vld [vmem:[%s217 + $0xa0] sm:$0xff]
      %v254 = vld [vmem:[%s217 + $0xa8] sm:$0xff]
      %v255 = vld [vmem:[%s217 + $0xb0] sm:$0xff]
      %v256 = vld [vmem:[%s217 + $0xb8] sm:$0xff]
      %v257 = vld [vmem:[%s217 + $0xc0] sm:$0xff]
      %v258 = vld [vmem:[%s217 + $0xc8] sm:$0xff]
      %v259 = vld [vmem:[%s217 + $0xd0] sm:$0xff]
      %v260 = vld [vmem:[%s217 + $0xd8] sm:$0xff]
      %v261 = vld [vmem:[%s217 + $0xe0] sm:$0xff]
      %v262 = vld [vmem:[%s217 + $0xe8] sm:$0xff]
      %v263 = vld [vmem:[%s217 + $0xf0] sm:$0xff]
      %v264 = vld [vmem:[%s217 + $0xf8] sm:$0xff]
      %vm265 = vcmask 31744
      %266 = vst.msk [vmem:[#allocation2] sm:$0xff] %vm265, 0.0
      %267 = vst.msk [vmem:[#allocation2 + $0x8] sm:$0xff] %vm265, 0.0
      %vm268 = vcmask 25600
      %269 = vst.msk [vmem:[#allocation2 + $0x10] sm:$0x3] %vm268, 0.0
      %s270 = scalar_lea.vmem [#allocation2], 408
      %271 = vst.msk [vmem:[%s270] sm:$0xff] %vm265, 0.0
      %272 = vst.msk [vmem:[%s270 + $0x8] sm:$0xff] %vm265, 0.0
      %273 = vst.msk [vmem:[%s270 + $0x10] sm:$0x3] %vm268, 0.0
      %vm274 = vcmask 24576
      %275 = vst.msk [vmem:[#allocation2] sm:$0x1] %vm274, 0.0
      %276 = vst.msk [vmem:[#allocation2 + $0x18] sm:$0x1] %vm274, 0.0
      %277 = vst.msk [vmem:[#allocation2 + $0x30] sm:$0x1] %vm274, 0.0
      %278 = vst.msk [vmem:[#allocation2 + $0x48] sm:$0x1] %vm274, 0.0
      %279 = vst.msk [vmem:[#allocation2 + $0x60] sm:$0x1] %vm274, 0.0
      %280 = vst.msk [vmem:[#allocation2 + $0x78] sm:$0x1] %vm274, 0.0
      %281 = vst.msk [vmem:[#allocation2 + $0x90] sm:$0x1] %vm274, 0.0
      %282 = vst.msk [vmem:[#allocation2 + $0xa8] sm:$0x1] %vm274, 0.0
      %283 = vst.msk [vmem:[#allocation2 + $0xc0] sm:$0x1] %vm274, 0.0
      %284 = vst.msk [vmem:[#allocation2 + $0xd8] sm:$0x1] %vm274, 0.0
      %285 = vst.msk [vmem:[#allocation2 + $0xf0] sm:$0x1] %vm274, 0.0
      %286 = vst.msk [vmem:[#allocation2 + $0x108] sm:$0x1] %vm274, 0.0
      %287 = vst.msk [vmem:[#allocation2 + $0x120] sm:$0x1] %vm274, 0.0
      %288 = vst.msk [vmem:[#allocation2 + $0x138] sm:$0x1] %vm274, 0.0
      %289 = vst.msk [vmem:[#allocation2 + $0x150] sm:$0x1] %vm274, 0.0
      %290 = vst.msk [vmem:[#allocation2 + $0x168] sm:$0x1] %vm274, 0.0
      %291 = vst.msk [vmem:[#allocation2 + $0x180] sm:$0x1] %vm274, 0.0
      %292 = vst.msk [vmem:[#allocation2 + $0x198] sm:$0x1] %vm274, 0.0
      %293 = vst.msk [vmem:[#allocation2 + $0x11] sm:$0x1] %vm274, 0.0
      %294 = vst.msk [vmem:[#allocation2 + $0x29] sm:$0x1] %vm274, 0.0
      %295 = vst.msk [vmem:[#allocation2 + $0x41] sm:$0x1] %vm274, 0.0
      %296 = vst.msk [vmem:[#allocation2 + $0x59] sm:$0x1] %vm274, 0.0
      %297 = vst.msk [vmem:[#allocation2 + $0x71] sm:$0x1] %vm274, 0.0
      %298 = vst.msk [vmem:[#allocation2 + $0x89] sm:$0x1] %vm274, 0.0
      %299 = vst.msk [vmem:[#allocation2 + $0xa1] sm:$0x1] %vm274, 0.0
      %300 = vst.msk [vmem:[#allocation2 + $0xb9] sm:$0x1] %vm274, 0.0
      %301 = vst.msk [vmem:[#allocation2 + $0xd1] sm:$0x1] %vm274, 0.0
      %302 = vst.msk [vmem:[#allocation2 + $0xe9] sm:$0x1] %vm274, 0.0
      %303 = vst.msk [vmem:[#allocation2 + $0x101] sm:$0x1] %vm274, 0.0
      %304 = vst.msk [vmem:[#allocation2 + $0x119] sm:$0x1] %vm274, 0.0
      %305 = vst.msk [vmem:[#allocation2 + $0x131] sm:$0x1] %vm274, 0.0
      %306 = vst.msk [vmem:[#allocation2 + $0x149] sm:$0x1] %vm274, 0.0
      %307 = vst.msk [vmem:[#allocation2 + $0x161] sm:$0x1] %vm274, 0.0
      %308 = vst.msk [vmem:[#allocation2 + $0x179] sm:$0x1] %vm274, 0.0
      %309 = vst.msk [vmem:[#allocation2 + $0x191] sm:$0x1] %vm274, 0.0
      %310 = vst.msk [vmem:[#allocation2 + $0x1a9] sm:$0x1] %vm274, 0.0
      %s311 = scalar_lea.vmem [#allocation2], 24
      %312 = vst.msk [vmem:[%s311 + $0x1] sm:$0xff] %vm265, %v233
      %313 = vst.msk [vmem:[%s311 + $0x9] sm:$0xff] %vm265, %v234
      %314 = vst.msk [vmem:[%s311 + $0x19] sm:$0xff] %vm265, %v235
      %315 = vst.msk [vmem:[%s311 + $0x21] sm:$0xff] %vm265, %v236
      %316 = vst.msk [vmem:[%s311 + $0x31] sm:$0xff] %vm265, %v237
      %317 = vst.msk [vmem:[%s311 + $0x39] sm:$0xff] %vm265, %v238
      %318 = vst.msk [vmem:[%s311 + $0x49] sm:$0xff] %vm265, %v239
      %319 = vst.msk [vmem:[%s311 + $0x51] sm:$0xff] %vm265, %v240
      %320 = vst.msk [vmem:[%s311 + $0x61] sm:$0xff] %vm265, %v241
      %321 = vst.msk [vmem:[%s311 + $0x69] sm:$0xff] %vm265, %v242
      %322 = vst.msk [vmem:[%s311 + $0x79] sm:$0xff] %vm265, %v243
      %323 = vst.msk [vmem:[%s311 + $0x81] sm:$0xff] %vm265, %v244
      %324 = vst.msk [vmem:[%s311 + $0x91] sm:$0xff] %vm265, %v245
      %325 = vst.msk [vmem:[%s311 + $0x99] sm:$0xff] %vm265, %v246
      %326 = vst.msk [vmem:[%s311 + $0xa9] sm:$0xff] %vm265, %v247
      %327 = vst.msk [vmem:[%s311 + $0xb1] sm:$0xff] %vm265, %v248
      %328 = vst.msk [vmem:[%s311 + $0xc1] sm:$0xff] %vm265, %v249
      %329 = vst.msk [vmem:[%s311 + $0xc9] sm:$0xff] %vm265, %v250
      %330 = vst.msk [vmem:[%s311 + $0xd9] sm:$0xff] %vm265, %v251
      %331 = vst.msk [vmem:[%s311 + $0xe1] sm:$0xff] %vm265, %v252
      %332 = vst.msk [vmem:[%s311 + $0xf1] sm:$0xff] %vm265, %v253
      %333 = vst.msk [vmem:[%s311 + $0xf9] sm:$0xff] %vm265, %v254
      %334 = vst.msk [vmem:[%s311 + $0x109] sm:$0xff] %vm265, %v255
      %335 = vst.msk [vmem:[%s311 + $0x111] sm:$0xff] %vm265, %v256
      %336 = vst.msk [vmem:[%s311 + $0x121] sm:$0xff] %vm265, %v257
      %337 = vst.msk [vmem:[%s311 + $0x129] sm:$0xff] %vm265, %v258
      %338 = vst.msk [vmem:[%s311 + $0x139] sm:$0xff] %vm265, %v259
      %339 = vst.msk [vmem:[%s311 + $0x141] sm:$0xff] %vm265, %v260
      %340 = vst.msk [vmem:[%s311 + $0x151] sm:$0xff] %vm265, %v261
      %341 = vst.msk [vmem:[%s311 + $0x159] sm:$0xff] %vm265, %v262
      %342 = vst.msk [vmem:[%s311 + $0x169] sm:$0xff] %vm265, %v263
      %343 = vst.msk [vmem:[%s311 + $0x171] sm:$0xff] %vm265, %v264
      %v344 = vld [vmem:[%s221] sm:$0x7]
      %v345 = vld [vmem:[%s221 + $0x4] sm:$0x7]
      %v346 = vld [vmem:[%s221 + $0x8] sm:$0x7]
      %v347 = vld [vmem:[%s224] sm:$0x1]
      %v348 = vld [vmem:[#allocation2] sm:$0xff]
      %v349 = vld [vmem:[#allocation2 + $0x8] sm:$0xff]
      %v350 = vld [vmem:[#allocation2 + $0x18] sm:$0xff]
      %v351 = vld [vmem:[#allocation2 + $0x20] sm:$0xff]
      %v352 = vld [vmem:[#allocation2 + $0x30] sm:$0xff]
      %v353 = vld [vmem:[#allocation2 + $0x38] sm:$0xff]
      %v354 = vld [vmem:[#allocation2 + $0x48] sm:$0xff]
      %v355 = vld [vmem:[#allocation2 + $0x50] sm:$0xff]
      %v356 = vld [vmem:[#allocation2 + $0x60] sm:$0xff]
      %v357 = vld [vmem:[#allocation2 + $0x68] sm:$0xff]
      %v358 = vld [vmem:[#allocation2 + $0x78] sm:$0xff]
      %v359 = vld [vmem:[#allocation2 + $0x80] sm:$0xff]
      %v360 = vld [vmem:[#allocation2 + $0x90] sm:$0xff]
      %v361 = vld [vmem:[#allocation2 + $0x98] sm:$0xff]
      %v362 = vld [vmem:[#allocation2 + $0xa8] sm:$0xff]
      %v363 = vld [vmem:[#allocation2 + $0xb0] sm:$0xff]
      %v364 = vld [vmem:[#allocation2 + $0xc0] sm:$0xff]
      %v365 = vld [vmem:[#allocation2 + $0xc8] sm:$0xff]
      %v366 = vld [vmem:[#allocation2 + $0xd8] sm:$0xff]
      %v367 = vld [vmem:[#allocation2 + $0xe0] sm:$0xff]
      %v368 = vld [vmem:[#allocation2 + $0xf0] sm:$0xff]
      %v369 = vld [vmem:[#allocation2 + $0xf8] sm:$0xff]
      %v370 = vld [vmem:[#allocation2 + $0x108] sm:$0xff]
      %v371 = vld [vmem:[#allocation2 + $0x110] sm:$0xff]
      %v372 = vld [vmem:[#allocation2 + $0x120] sm:$0xff]
      %v373 = vld [vmem:[#allocation2 + $0x128] sm:$0xff]
      %v374 = vld [vmem:[#allocation2 + $0x138] sm:$0xff]
      %v375 = vld [vmem:[#allocation2 + $0x140] sm:$0xff]
      %v376 = vld [vmem:[#allocation2 + $0x150] sm:$0xff]
      %v377 = vld [vmem:[#allocation2 + $0x158] sm:$0xff]
      %v378 = vld [vmem:[#allocation2 + $0x168] sm:$0xff]
      %v379 = vld [vmem:[#allocation2 + $0x170] sm:$0xff]
      %v380 = vlaneseq
      %v381 = vshrl.u32 %v380, 7
      %v382 = vsub.s32 0, %v381
      %v383 = vrot.slane %v344, %v382
      %v384 = vmul.f32 %v348, %v383
      %v385 = vmul.f32 %v349, %v383
      %v386 = vmul.f32 %v350, %v383
      %v387 = vmul.f32 %v351, %v383
      %v388 = vmul.f32 %v352, %v383
      %v389 = vmul.f32 %v353, %v383
      %v390 = vmul.f32 %v354, %v383
      %v391 = vmul.f32 %v355, %v383
      %v392 = vmul.f32 %v356, %v383
      %v393 = vmul.f32 %v357, %v383
      %v394 = vmul.f32 %v358, %v383
      %v395 = vmul.f32 %v359, %v383
      %v396 = vmul.f32 %v360, %v383
      %v397 = vmul.f32 %v361, %v383
      %v398 = vmul.f32 %v362, %v383
      %v399 = vmul.f32 %v363, %v383
      %v400 = vmul.f32 %v364, %v383
      %v401 = vmul.f32 %v365, %v383
      %v402 = vmul.f32 %v366, %v383
      %v403 = vmul.f32 %v367, %v383
      %v404 = vmul.f32 %v368, %v383
      %v405 = vmul.f32 %v369, %v383
      %v406 = vmul.f32 %v370, %v383
      %v407 = vmul.f32 %v371, %v383
      %v408 = vmul.f32 %v372, %v383
      %v409 = vmul.f32 %v373, %v383
      %v410 = vmul.f32 %v374, %v383
      %v411 = vmul.f32 %v375, %v383
      %v412 = vmul.f32 %v376, %v383
      %v413 = vmul.f32 %v377, %v383
      %v414 = vmul.f32 %v378, %v383
      %v415 = vmul.f32 %v379, %v383
      %v417 = vlaneseq
      %v418 = vshrl.u32 %v417, 7
      %v419 = vsub.s32 0, %v418
      %v420 = vrot.slane %v347, %v419
      %v422 = vadd.f32 %v384, %v420
      %v423 = vadd.f32 %v385, %v420
      %v424 = vadd.f32 %v386, %v420
      %v425 = vadd.f32 %v387, %v420
      %v426 = vadd.f32 %v388, %v420
      %v427 = vadd.f32 %v389, %v420
      %v428 = vadd.f32 %v390, %v420
      %v429 = vadd.f32 %v391, %v420
      %v430 = vadd.f32 %v392, %v420
      %v431 = vadd.f32 %v393, %v420
      %v432 = vadd.f32 %v394, %v420
      %v433 = vadd.f32 %v395, %v420
      %v434 = vadd.f32 %v396, %v420
      %v435 = vadd.f32 %v397, %v420
      %v436 = vadd.f32 %v398, %v420
      %v437 = vadd.f32 %v399, %v420
      %v438 = vadd.f32 %v400, %v420
      %v439 = vadd.f32 %v401, %v420
      %v440 = vadd.f32 %v402, %v420
      %v441 = vadd.f32 %v403, %v420
      %v442 = vadd.f32 %v404, %v420
      %v443 = vadd.f32 %v405, %v420
      %v444 = vadd.f32 %v406, %v420
      %v445 = vadd.f32 %v407, %v420
      %v446 = vadd.f32 %v408, %v420
      %v447 = vadd.f32 %v409, %v420
      %v448 = vadd.f32 %v410, %v420
      %v449 = vadd.f32 %v411, %v420
      %v450 = vadd.f32 %v412, %v420
      %v451 = vadd.f32 %v413, %v420
      %v452 = vadd.f32 %v414, %v420
      %v453 = vadd.f32 %v415, %v420
      %v454 = vld [vmem:[#allocation2 + $0x1] sm:$0xff]
      %v455 = vld [vmem:[#allocation2 + $0x9] sm:$0xff]
      %v456 = vld [vmem:[#allocation2 + $0x19] sm:$0xff]
      %v457 = vld [vmem:[#allocation2 + $0x21] sm:$0xff]
      %v458 = vld [vmem:[#allocation2 + $0x31] sm:$0xff]
      %v459 = vld [vmem:[#allocation2 + $0x39] sm:$0xff]
      %v460 = vld [vmem:[#allocation2 + $0x49] sm:$0xff]
      %v461 = vld [vmem:[#allocation2 + $0x51] sm:$0xff]
      %v462 = vld [vmem:[#allocation2 + $0x61] sm:$0xff]
      %v463 = vld [vmem:[#allocation2 + $0x69] sm:$0xff]
      %v464 = vld [vmem:[#allocation2 + $0x79] sm:$0xff]
      %v465 = vld [vmem:[#allocation2 + $0x81] sm:$0xff]
      %v466 = vld [vmem:[#allocation2 + $0x91] sm:$0xff]
      %v467 = vld [vmem:[#allocation2 + $0x99] sm:$0xff]
      %v468 = vld [vmem:[#allocation2 + $0xa9] sm:$0xff]
      %v469 = vld [vmem:[#allocation2 + $0xb1] sm:$0xff]
      %v470 = vld [vmem:[#allocation2 + $0xc1] sm:$0xff]
      %v471 = vld [vmem:[#allocation2 + $0xc9] sm:$0xff]
      %v472 = vld [vmem:[#allocation2 + $0xd9] sm:$0xff]
      %v473 = vld [vmem:[#allocation2 + $0xe1] sm:$0xff]
      %v474 = vld [vmem:[#allocation2 + $0xf1] sm:$0xff]
      %v475 = vld [vmem:[#allocation2 + $0xf9] sm:$0xff]
      %v476 = vld [vmem:[#allocation2 + $0x109] sm:$0xff]
      %v477 = vld [vmem:[#allocation2 + $0x111] sm:$0xff]
      %v478 = vld [vmem:[#allocation2 + $0x121] sm:$0xff]
      %v479 = vld [vmem:[#allocation2 + $0x129] sm:$0xff]
      %v480 = vld [vmem:[#allocation2 + $0x139] sm:$0xff]
      %v481 = vld [vmem:[#allocation2 + $0x141] sm:$0xff]
      %v482 = vld [vmem:[#allocation2 + $0x151] sm:$0xff]
      %v483 = vld [vmem:[#allocation2 + $0x159] sm:$0xff]
      %v484 = vld [vmem:[#allocation2 + $0x169] sm:$0xff]
      %v485 = vld [vmem:[#allocation2 + $0x171] sm:$0xff]
      %v486 = vlaneseq
      %v487 = vshrl.u32 %v486, 7
      %v488 = vsub.s32 1, %v487
      %v489 = vrot.slane %v344, %v488
      %v490 = vmul.f32 %v454, %v489
      %v491 = vmul.f32 %v455, %v489
      %v492 = vmul.f32 %v456, %v489
      %v493 = vmul.f32 %v457, %v489
      %v494 = vmul.f32 %v458, %v489
      %v495 = vmul.f32 %v459, %v489
      %v496 = vmul.f32 %v460, %v489
      %v497 = vmul.f32 %v461, %v489
      %v498 = vmul.f32 %v462, %v489
      %v499 = vmul.f32 %v463, %v489
      %v500 = vmul.f32 %v464, %v489
      %v501 = vmul.f32 %v465, %v489
      %v502 = vmul.f32 %v466, %v489
      %v503 = vmul.f32 %v467, %v489
      %v504 = vmul.f32 %v468, %v489
      %v505 = vmul.f32 %v469, %v489
      %v506 = vmul.f32 %v470, %v489
      %v507 = vmul.f32 %v471, %v489
      %v508 = vmul.f32 %v472, %v489
      %v509 = vmul.f32 %v473, %v489
      %v510 = vmul.f32 %v474, %v489
      %v511 = vmul.f32 %v475, %v489
      %v512 = vmul.f32 %v476, %v489
      %v513 = vmul.f32 %v477, %v489
      %v514 = vmul.f32 %v478, %v489
      %v515 = vmul.f32 %v479, %v489
      %v516 = vmul.f32 %v480, %v489
      %v517 = vmul.f32 %v481, %v489
      %v518 = vmul.f32 %v482, %v489
      %v519 = vmul.f32 %v483, %v489
      %v520 = vmul.f32 %v484, %v489
      %v521 = vmul.f32 %v485, %v489
      %v522 = vadd.f32 %v422, %v490
      %v523 = vadd.f32 %v423, %v491
      %v524 = vadd.f32 %v424, %v492
      %v525 = vadd.f32 %v425, %v493
      %v526 = vadd.f32 %v426, %v494
      %v527 = vadd.f32 %v427, %v495
      %v528 = vadd.f32 %v428, %v496
      %v529 = vadd.f32 %v429, %v497
      %v530 = vadd.f32 %v430, %v498
      %v531 = vadd.f32 %v431, %v499
      %v532 = vadd.f32 %v432, %v500
      %v533 = vadd.f32 %v433, %v501
      %v534 = vadd.f32 %v434, %v502
      %v535 = vadd.f32 %v435, %v503
      %v536 = vadd.f32 %v436, %v504
      %v537 = vadd.f32 %v437, %v505
      %v538 = vadd.f32 %v438, %v506
      %v539 = vadd.f32 %v439, %v507
      %v540 = vadd.f32 %v440, %v508
      %v541 = vadd.f32 %v441, %v509
      %v542 = vadd.f32 %v442, %v510
      %v543 = vadd.f32 %v443, %v511
      %v544 = vadd.f32 %v444, %v512
      %v545 = vadd.f32 %v445, %v513
      %v546 = vadd.f32 %v446, %v514
      %v547 = vadd.f32 %v447, %v515
      %v548 = vadd.f32 %v448, %v516
      %v549 = vadd.f32 %v449, %v517
      %v550 = vadd.f32 %v450, %v518
      %v551 = vadd.f32 %v451, %v519
      %v552 = vadd.f32 %v452, %v520
      %v553 = vadd.f32 %v453, %v521
      %v554 = vld [vmem:[#allocation2 + $0x2] sm:$0xff]
      %v555 = vld [vmem:[#allocation2 + $0xa] sm:$0xff]
      %v556 = vld [vmem:[#allocation2 + $0x1a] sm:$0xff]
      %v557 = vld [vmem:[#allocation2 + $0x22] sm:$0xff]
      %v558 = vld [vmem:[#allocation2 + $0x32] sm:$0xff]
      %v559 = vld [vmem:[#allocation2 + $0x3a] sm:$0xff]
      %v560 = vld [vmem:[#allocation2 + $0x4a] sm:$0xff]
      %v561 = vld [vmem:[#allocation2 + $0x52] sm:$0xff]
      %v562 = vld [vmem:[#allocation2 + $0x62] sm:$0xff]
      %v563 = vld [vmem:[#allocation2 + $0x6a] sm:$0xff]
      %v564 = vld [vmem:[#allocation2 + $0x7a] sm:$0xff]
      %v565 = vld [vmem:[#allocation2 + $0x82] sm:$0xff]
      %v566 = vld [vmem:[#allocation2 + $0x92] sm:$0xff]
      %v567 = vld [vmem:[#allocation2 + $0x9a] sm:$0xff]
      %v568 = vld [vmem:[#allocation2 + $0xaa] sm:$0xff]
      %v569 = vld [vmem:[#allocation2 + $0xb2] sm:$0xff]
      %v570 = vld [vmem:[#allocation2 + $0xc2] sm:$0xff]
      %v571 = vld [vmem:[#allocation2 + $0xca] sm:$0xff]
      %v572 = vld [vmem:[#allocation2 + $0xda] sm:$0xff]
      %v573 = vld [vmem:[#allocation2 + $0xe2] sm:$0xff]
      %v574 = vld [vmem:[#allocation2 + $0xf2] sm:$0xff]
      %v575 = vld [vmem:[#allocation2 + $0xfa] sm:$0xff]
      %v576 = vld [vmem:[#allocation2 + $0x10a] sm:$0xff]
      %v577 = vld [vmem:[#allocation2 + $0x112] sm:$0xff]
      %v578 = vld [vmem:[#allocation2 + $0x122] sm:$0xff]
      %v579 = vld [vmem:[#allocation2 + $0x12a] sm:$0xff]
      %v580 = vld [vmem:[#allocation2 + $0x13a] sm:$0xff]
      %v581 = vld [vmem:[#allocation2 + $0x142] sm:$0xff]
      %v582 = vld [vmem:[#allocation2 + $0x152] sm:$0xff]
      %v583 = vld [vmem:[#allocation2 + $0x15a] sm:$0xff]
      %v584 = vld [vmem:[#allocation2 + $0x16a] sm:$0xff]
      %v585 = vld [vmem:[#allocation2 + $0x172] sm:$0xff]
      %v586 = vlaneseq
      %v587 = vshrl.u32 %v586, 7
      %v588 = vsub.s32 2, %v587
      %v589 = vrot.slane %v344, %v588
      %v590 = vmul.f32 %v554, %v589
      %v591 = vmul.f32 %v555, %v589
      %v592 = vmul.f32 %v556, %v589
      %v593 = vmul.f32 %v557, %v589
      %v594 = vmul.f32 %v558, %v589
      %v595 = vmul.f32 %v559, %v589
      %v596 = vmul.f32 %v560, %v589
      %v597 = vmul.f32 %v561, %v589
      %v598 = vmul.f32 %v562, %v589
      %v599 = vmul.f32 %v563, %v589
      %v600 = vmul.f32 %v564, %v589
      %v601 = vmul.f32 %v565, %v589
      %v602 = vmul.f32 %v566, %v589
      %v603 = vmul.f32 %v567, %v589
      %v604 = vmul.f32 %v568, %v589
      %v605 = vmul.f32 %v569, %v589
      %v606 = vmul.f32 %v570, %v589
      %v607 = vmul.f32 %v571, %v589
      %v608 = vmul.f32 %v572, %v589
      %v609 = vmul.f32 %v573, %v589
      %v610 = vmul.f32 %v574, %v589
      %v611 = vmul.f32 %v575, %v589
      %v612 = vmul.f32 %v576, %v589
      %v613 = vmul.f32 %v577, %v589
      %v614 = vmul.f32 %v578, %v589
      %v615 = vmul.f32 %v579, %v589
      %v616 = vmul.f32 %v580, %v589
      %v617 = vmul.f32 %v581, %v589
      %v618 = vmul.f32 %v582, %v589
      %v619 = vmul.f32 %v583, %v589
      %v620 = vmul.f32 %v584, %v589
      %v621 = vmul.f32 %v585, %v589
      %v622 = vadd.f32 %v522, %v590
      %v623 = vadd.f32 %v523, %v591
      %v624 = vadd.f32 %v524, %v592
      %v625 = vadd.f32 %v525, %v593
      %v626 = vadd.f32 %v526, %v594
      %v627 = vadd.f32 %v527, %v595
      %v628 = vadd.f32 %v528, %v596
      %v629 = vadd.f32 %v529, %v597
      %v630 = vadd.f32 %v530, %v598
      %v631 = vadd.f32 %v531, %v599
      %v632 = vadd.f32 %v532, %v600
      %v633 = vadd.f32 %v533, %v601
      %v634 = vadd.f32 %v534, %v602
      %v635 = vadd.f32 %v535, %v603
      %v636 = vadd.f32 %v536, %v604
      %v637 = vadd.f32 %v537, %v605
      %v638 = vadd.f32 %v538, %v606
      %v639 = vadd.f32 %v539, %v607
      %v640 = vadd.f32 %v540, %v608
      %v641 = vadd.f32 %v541, %v609
      %v642 = vadd.f32 %v542, %v610
      %v643 = vadd.f32 %v543, %v611
      %v644 = vadd.f32 %v544, %v612
      %v645 = vadd.f32 %v545, %v613
      %v646 = vadd.f32 %v546, %v614
      %v647 = vadd.f32 %v547, %v615
      %v648 = vadd.f32 %v548, %v616
      %v649 = vadd.f32 %v549, %v617
      %v650 = vadd.f32 %v550, %v618
      %v651 = vadd.f32 %v551, %v619
      %v652 = vadd.f32 %v552, %v620
      %v653 = vadd.f32 %v553, %v621
      %v654 = vld [vmem:[%s311] sm:$0xff]
      %v655 = vld [vmem:[%s311 + $0x8] sm:$0xff]
      %v656 = vld [vmem:[%s311 + $0x18] sm:$0xff]
      %v657 = vld [vmem:[%s311 + $0x20] sm:$0xff]
      %v658 = vld [vmem:[%s311 + $0x30] sm:$0xff]
      %v659 = vld [vmem:[%s311 + $0x38] sm:$0xff]
      %v660 = vld [vmem:[%s311 + $0x48] sm:$0xff]
      %v661 = vld [vmem:[%s311 + $0x50] sm:$0xff]
      %v662 = vld [vmem:[%s311 + $0x60] sm:$0xff]
      %v663 = vld [vmem:[%s311 + $0x68] sm:$0xff]
      %v664 = vld [vmem:[%s311 + $0x78] sm:$0xff]
      %v665 = vld [vmem:[%s311 + $0x80] sm:$0xff]
      %v666 = vld [vmem:[%s311 + $0x90] sm:$0xff]
      %v667 = vld [vmem:[%s311 + $0x98] sm:$0xff]
      %v668 = vld [vmem:[%s311 + $0xa8] sm:$0xff]
      %v669 = vld [vmem:[%s311 + $0xb0] sm:$0xff]
      %v670 = vld [vmem:[%s311 + $0xc0] sm:$0xff]
      %v671 = vld [vmem:[%s311 + $0xc8] sm:$0xff]
      %v672 = vld [vmem:[%s311 + $0xd8] sm:$0xff]
      %v673 = vld [vmem:[%s311 + $0xe0] sm:$0xff]
      %v674 = vld [vmem:[%s311 + $0xf0] sm:$0xff]
      %v675 = vld [vmem:[%s311 + $0xf8] sm:$0xff]
      %v676 = vld [vmem:[%s311 + $0x108] sm:$0xff]
      %v677 = vld [vmem:[%s311 + $0x110] sm:$0xff]
      %v678 = vld [vmem:[%s311 + $0x120] sm:$0xff]
      %v679 = vld [vmem:[%s311 + $0x128] sm:$0xff]
      %v680 = vld [vmem:[%s311 + $0x138] sm:$0xff]
      %v681 = vld [vmem:[%s311 + $0x140] sm:$0xff]
      %v682 = vld [vmem:[%s311 + $0x150] sm:$0xff]
      %v683 = vld [vmem:[%s311 + $0x158] sm:$0xff]
      %v684 = vld [vmem:[%s311 + $0x168] sm:$0xff]
      %v685 = vld [vmem:[%s311 + $0x170] sm:$0xff]
      %v686 = vlaneseq
      %v687 = vshrl.u32 %v686, 7
      %v688 = vsub.s32 0, %v687
      %v689 = vrot.slane %v345, %v688
      %v690 = vmul.f32 %v654, %v689
      %v691 = vmul.f32 %v655, %v689
      %v692 = vmul.f32 %v656, %v689
      %v693 = vmul.f32 %v657, %v689
      %v694 = vmul.f32 %v658, %v689
      %v695 = vmul.f32 %v659, %v689
      %v696 = vmul.f32 %v660, %v689
      %v697 = vmul.f32 %v661, %v689
      %v698 = vmul.f32 %v662, %v689
      %v699 = vmul.f32 %v663, %v689
      %v700 = vmul.f32 %v664, %v689
      %v701 = vmul.f32 %v665, %v689
      %v702 = vmul.f32 %v666, %v689
      %v703 = vmul.f32 %v667, %v689
      %v704 = vmul.f32 %v668, %v689
      %v705 = vmul.f32 %v669, %v689
      %v706 = vmul.f32 %v670, %v689
      %v707 = vmul.f32 %v671, %v689
      %v708 = vmul.f32 %v672, %v689
      %v709 = vmul.f32 %v673, %v689
      %v710 = vmul.f32 %v674, %v689
      %v711 = vmul.f32 %v675, %v689
      %v712 = vmul.f32 %v676, %v689
      %v713 = vmul.f32 %v677, %v689
      %v714 = vmul.f32 %v678, %v689
      %v715 = vmul.f32 %v679, %v689
      %v716 = vmul.f32 %v680, %v689
      %v717 = vmul.f32 %v681, %v689
      %v718 = vmul.f32 %v682, %v689
      %v719 = vmul.f32 %v683, %v689
      %v720 = vmul.f32 %v684, %v689
      %v721 = vmul.f32 %v685, %v689
      %v722 = vadd.f32 %v622, %v690
      %v723 = vadd.f32 %v623, %v691
      %v724 = vadd.f32 %v624, %v692
      %v725 = vadd.f32 %v625, %v693
      %v726 = vadd.f32 %v626, %v694
      %v727 = vadd.f32 %v627, %v695
      %v728 = vadd.f32 %v628, %v696
      %v729 = vadd.f32 %v629, %v697
      %v730 = vadd.f32 %v630, %v698
      %v731 = vadd.f32 %v631, %v699
      %v732 = vadd.f32 %v632, %v700
      %v733 = vadd.f32 %v633, %v701
      %v734 = vadd.f32 %v634, %v702
      %v735 = vadd.f32 %v635, %v703
      %v736 = vadd.f32 %v636, %v704
      %v737 = vadd.f32 %v637, %v705
      %v738 = vadd.f32 %v638, %v706
      %v739 = vadd.f32 %v639, %v707
      %v740 = vadd.f32 %v640, %v708
      %v741 = vadd.f32 %v641, %v709
      %v742 = vadd.f32 %v642, %v710
      %v743 = vadd.f32 %v643, %v711
      %v744 = vadd.f32 %v644, %v712
      %v745 = vadd.f32 %v645, %v713
      %v746 = vadd.f32 %v646, %v714
      %v747 = vadd.f32 %v647, %v715
      %v748 = vadd.f32 %v648, %v716
      %v749 = vadd.f32 %v649, %v717
      %v750 = vadd.f32 %v650, %v718
      %v751 = vadd.f32 %v651, %v719
      %v752 = vadd.f32 %v652, %v720
      %v753 = vadd.f32 %v653, %v721
      %v754 = vld [vmem:[%s311 + $0x1] sm:$0xff]
      %v755 = vld [vmem:[%s311 + $0x9] sm:$0xff]
      %v756 = vld [vmem:[%s311 + $0x19] sm:$0xff]
      %v757 = vld [vmem:[%s311 + $0x21] sm:$0xff]
      %v758 = vld [vmem:[%s311 + $0x31] sm:$0xff]
      %v759 = vld [vmem:[%s311 + $0x39] sm:$0xff]
      %v760 = vld [vmem:[%s311 + $0x49] sm:$0xff]
      %v761 = vld [vmem:[%s311 + $0x51] sm:$0xff]
      %v762 = vld [vmem:[%s311 + $0x61] sm:$0xff]
      %v763 = vld [vmem:[%s311 + $0x69] sm:$0xff]
      %v764 = vld [vmem:[%s311 + $0x79] sm:$0xff]
      %v765 = vld [vmem:[%s311 + $0x81] sm:$0xff]
      %v766 = vld [vmem:[%s311 + $0x91] sm:$0xff]
      %v767 = vld [vmem:[%s311 + $0x99] sm:$0xff]
      %v768 = vld [vmem:[%s311 + $0xa9] sm:$0xff]
      %v769 = vld [vmem:[%s311 + $0xb1] sm:$0xff]
      %v770 = vld [vmem:[%s311 + $0xc1] sm:$0xff]
      %v771 = vld [vmem:[%s311 + $0xc9] sm:$0xff]
      %v772 = vld [vmem:[%s311 + $0xd9] sm:$0xff]
      %v773 = vld [vmem:[%s311 + $0xe1] sm:$0xff]
      %v774 = vld [vmem:[%s311 + $0xf1] sm:$0xff]
      %v775 = vld [vmem:[%s311 + $0xf9] sm:$0xff]
      %v776 = vld [vmem:[%s311 + $0x109] sm:$0xff]
      %v777 = vld [vmem:[%s311 + $0x111] sm:$0xff]
      %v778 = vld [vmem:[%s311 + $0x121] sm:$0xff]
      %v779 = vld [vmem:[%s311 + $0x129] sm:$0xff]
      %v780 = vld [vmem:[%s311 + $0x139] sm:$0xff]
      %v781 = vld [vmem:[%s311 + $0x141] sm:$0xff]
      %v782 = vld [vmem:[%s311 + $0x151] sm:$0xff]
      %v783 = vld [vmem:[%s311 + $0x159] sm:$0xff]
      %v784 = vld [vmem:[%s311 + $0x169] sm:$0xff]
      %v785 = vld [vmem:[%s311 + $0x171] sm:$0xff]
      %v786 = vlaneseq
      %v787 = vshrl.u32 %v786, 7
      %v788 = vsub.s32 1, %v787
      %v789 = vrot.slane %v345, %v788
      %v790 = vmul.f32 %v754, %v789
      %v791 = vmul.f32 %v755, %v789
      %v792 = vmul.f32 %v756, %v789
      %v793 = vmul.f32 %v757, %v789
      %v794 = vmul.f32 %v758, %v789
      %v795 = vmul.f32 %v759, %v789
      %v796 = vmul.f32 %v760, %v789
      %v797 = vmul.f32 %v761, %v789
      %v798 = vmul.f32 %v762, %v789
      %v799 = vmul.f32 %v763, %v789
      %v800 = vmul.f32 %v764, %v789
      %v801 = vmul.f32 %v765, %v789
      %v802 = vmul.f32 %v766, %v789
      %v803 = vmul.f32 %v767, %v789
      %v804 = vmul.f32 %v768, %v789
      %v805 = vmul.f32 %v769, %v789
      %v806 = vmul.f32 %v770, %v789
      %v807 = vmul.f32 %v771, %v789
      %v808 = vmul.f32 %v772, %v789
      %v809 = vmul.f32 %v773, %v789
      %v810 = vmul.f32 %v774, %v789
      %v811 = vmul.f32 %v775, %v789
      %v812 = vmul.f32 %v776, %v789
      %v813 = vmul.f32 %v777, %v789
      %v814 = vmul.f32 %v778, %v789
      %v815 = vmul.f32 %v779, %v789
      %v816 = vmul.f32 %v780, %v789
      %v817 = vmul.f32 %v781, %v789
      %v818 = vmul.f32 %v782, %v789
      %v819 = vmul.f32 %v783, %v789
      %v820 = vmul.f32 %v784, %v789
      %v821 = vmul.f32 %v785, %v789
      %v822 = vadd.f32 %v722, %v790
      %v823 = vadd.f32 %v723, %v791
      %v824 = vadd.f32 %v724, %v792
      %v825 = vadd.f32 %v725, %v793
      %v826 = vadd.f32 %v726, %v794
      %v827 = vadd.f32 %v727, %v795
      %v828 = vadd.f32 %v728, %v796
      %v829 = vadd.f32 %v729, %v797
      %v830 = vadd.f32 %v730, %v798
      %v831 = vadd.f32 %v731, %v799
      %v832 = vadd.f32 %v732, %v800
      %v833 = vadd.f32 %v733, %v801
      %v834 = vadd.f32 %v734, %v802
      %v835 = vadd.f32 %v735, %v803
      %v836 = vadd.f32 %v736, %v804
      %v837 = vadd.f32 %v737, %v805
      %v838 = vadd.f32 %v738, %v806
      %v839 = vadd.f32 %v739, %v807
      %v840 = vadd.f32 %v740, %v808
      %v841 = vadd.f32 %v741, %v809
      %v842 = vadd.f32 %v742, %v810
      %v843 = vadd.f32 %v743, %v811
      %v844 = vadd.f32 %v744, %v812
      %v845 = vadd.f32 %v745, %v813
      %v846 = vadd.f32 %v746, %v814
      %v847 = vadd.f32 %v747, %v815
      %v848 = vadd.f32 %v748, %v816
      %v849 = vadd.f32 %v749, %v817
      %v850 = vadd.f32 %v750, %v818
      %v851 = vadd.f32 %v751, %v819
      %v852 = vadd.f32 %v752, %v820
      %v853 = vadd.f32 %v753, %v821
      %v854 = vld [vmem:[%s311 + $0x2] sm:$0xff]
      %v855 = vld [vmem:[%s311 + $0xa] sm:$0xff]
      %v856 = vld [vmem:[%s311 + $0x1a] sm:$0xff]
      %v857 = vld [vmem:[%s311 + $0x22] sm:$0xff]
      %v858 = vld [vmem:[%s311 + $0x32] sm:$0xff]
      %v859 = vld [vmem:[%s311 + $0x3a] sm:$0xff]
      %v860 = vld [vmem:[%s311 + $0x4a] sm:$0xff]
      %v861 = vld [vmem:[%s311 + $0x52] sm:$0xff]
      %v862 = vld [vmem:[%s311 + $0x62] sm:$0xff]
      %v863 = vld [vmem:[%s311 + $0x6a] sm:$0xff]
      %v864 = vld [vmem:[%s311 + $0x7a] sm:$0xff]
      %v865 = vld [vmem:[%s311 + $0x82] sm:$0xff]
      %v866 = vld [vmem:[%s311 + $0x92] sm:$0xff]
      %v867 = vld [vmem:[%s311 + $0x9a] sm:$0xff]
      %v868 = vld [vmem:[%s311 + $0xaa] sm:$0xff]
      %v869 = vld [vmem:[%s311 + $0xb2] sm:$0xff]
      %v870 = vld [vmem:[%s311 + $0xc2] sm:$0xff]
      %v871 = vld [vmem:[%s311 + $0xca] sm:$0xff]
      %v872 = vld [vmem:[%s311 + $0xda] sm:$0xff]
      %v873 = vld [vmem:[%s311 + $0xe2] sm:$0xff]
      %v874 = vld [vmem:[%s311 + $0xf2] sm:$0xff]
      %v875 = vld [vmem:[%s311 + $0xfa] sm:$0xff]
      %v876 = vld [vmem:[%s311 + $0x10a] sm:$0xff]
      %v877 = vld [vmem:[%s311 + $0x112] sm:$0xff]
      %v878 = vld [vmem:[%s311 + $0x122] sm:$0xff]
      %v879 = vld [vmem:[%s311 + $0x12a] sm:$0xff]
      %v880 = vld [vmem:[%s311 + $0x13a] sm:$0xff]
      %v881 = vld [vmem:[%s311 + $0x142] sm:$0xff]
      %v882 = vld [vmem:[%s311 + $0x152] sm:$0xff]
      %v883 = vld [vmem:[%s311 + $0x15a] sm:$0xff]
      %v884 = vld [vmem:[%s311 + $0x16a] sm:$0xff]
      %v885 = vld [vmem:[%s311 + $0x172] sm:$0xff]
      %v886 = vlaneseq
      %v887 = vshrl.u32 %v886, 7
      %v888 = vsub.s32 2, %v887
      %v889 = vrot.slane %v345, %v888
      %v890 = vmul.f32 %v854, %v889
      %v891 = vmul.f32 %v855, %v889
      %v892 = vmul.f32 %v856, %v889
      %v893 = vmul.f32 %v857, %v889
      %v894 = vmul.f32 %v858, %v889
      %v895 = vmul.f32 %v859, %v889
      %v896 = vmul.f32 %v860, %v889
      %v897 = vmul.f32 %v861, %v889
      %v898 = vmul.f32 %v862, %v889
      %v899 = vmul.f32 %v863, %v889
      %v900 = vmul.f32 %v864, %v889
      %v901 = vmul.f32 %v865, %v889
      %v902 = vmul.f32 %v866, %v889
      %v903 = vmul.f32 %v867, %v889
      %v904 = vmul.f32 %v868, %v889
      %v905 = vmul.f32 %v869, %v889
      %v906 = vmul.f32 %v870, %v889
      %v907 = vmul.f32 %v871, %v889
      %v908 = vmul.f32 %v872, %v889
      %v909 = vmul.f32 %v873, %v889
      %v910 = vmul.f32 %v874, %v889
      %v911 = vmul.f32 %v875, %v889
      %v912 = vmul.f32 %v876, %v889
      %v913 = vmul.f32 %v877, %v889
      %v914 = vmul.f32 %v878, %v889
      %v915 = vmul.f32 %v879, %v889
      %v916 = vmul.f32 %v880, %v889
      %v917 = vmul.f32 %v881, %v889
      %v918 = vmul.f32 %v882, %v889
      %v919 = vmul.f32 %v883, %v889
      %v920 = vmul.f32 %v884, %v889
      %v921 = vmul.f32 %v885, %v889
      %v922 = vadd.f32 %v822, %v890
      %v923 = vadd.f32 %v823, %v891
      %v924 = vadd.f32 %v824, %v892
      %v925 = vadd.f32 %v825, %v893
      %v926 = vadd.f32 %v826, %v894
      %v927 = vadd.f32 %v827, %v895
      %v928 = vadd.f32 %v828, %v896
      %v929 = vadd.f32 %v829, %v897
      %v930 = vadd.f32 %v830, %v898
      %v931 = vadd.f32 %v831, %v899
      %v932 = vadd.f32 %v832, %v900
      %v933 = vadd.f32 %v833, %v901
      %v934 = vadd.f32 %v834, %v902
      %v935 = vadd.f32 %v835, %v903
      %v936 = vadd.f32 %v836, %v904
      %v937 = vadd.f32 %v837, %v905
      %v938 = vadd.f32 %v838, %v906
      %v939 = vadd.f32 %v839, %v907
      %v940 = vadd.f32 %v840, %v908
      %v941 = vadd.f32 %v841, %v909
      %v942 = vadd.f32 %v842, %v910
      %v943 = vadd.f32 %v843, %v911
      %v944 = vadd.f32 %v844, %v912
      %v945 = vadd.f32 %v845, %v913
      %v946 = vadd.f32 %v846, %v914
      %v947 = vadd.f32 %v847, %v915
      %v948 = vadd.f32 %v848, %v916
      %v949 = vadd.f32 %v849, %v917
      %v950 = vadd.f32 %v850, %v918
      %v951 = vadd.f32 %v851, %v919
      %v952 = vadd.f32 %v852, %v920
      %v953 = vadd.f32 %v853, %v921
      %s954 = scalar_lea.vmem [#allocation2], 48
      %v955 = vld [vmem:[%s954] sm:$0xff]
      %v956 = vld [vmem:[%s954 + $0x8] sm:$0xff]
      %v957 = vld [vmem:[%s954 + $0x18] sm:$0xff]
      %v958 = vld [vmem:[%s954 + $0x20] sm:$0xff]
      %v959 = vld [vmem:[%s954 + $0x30] sm:$0xff]
      %v960 = vld [vmem:[%s954 + $0x38] sm:$0xff]
      %v961 = vld [vmem:[%s954 + $0x48] sm:$0xff]
      %v962 = vld [vmem:[%s954 + $0x50] sm:$0xff]
      %v963 = vld [vmem:[%s954 + $0x60] sm:$0xff]
      %v964 = vld [vmem:[%s954 + $0x68] sm:$0xff]
      %v965 = vld [vmem:[%s954 + $0x78] sm:$0xff]
      %v966 = vld [vmem:[%s954 + $0x80] sm:$0xff]
      %v967 = vld [vmem:[%s954 + $0x90] sm:$0xff]
      %v968 = vld [vmem:[%s954 + $0x98] sm:$0xff]
      %v969 = vld [vmem:[%s954 + $0xa8] sm:$0xff]
      %v970 = vld [vmem:[%s954 + $0xb0] sm:$0xff]
      %v971 = vld [vmem:[%s954 + $0xc0] sm:$0xff]
      %v972 = vld [vmem:[%s954 + $0xc8] sm:$0xff]
      %v973 = vld [vmem:[%s954 + $0xd8] sm:$0xff]
      %v974 = vld [vmem:[%s954 + $0xe0] sm:$0xff]
      %v975 = vld [vmem:[%s954 + $0xf0] sm:$0xff]
      %v976 = vld [vmem:[%s954 + $0xf8] sm:$0xff]
      %v977 = vld [vmem:[%s954 + $0x108] sm:$0xff]
      %v978 = vld [vmem:[%s954 + $0x110] sm:$0xff]
      %v979 = vld [vmem:[%s954 + $0x120] sm:$0xff]
      %v980 = vld [vmem:[%s954 + $0x128] sm:$0xff]
      %v981 = vld [vmem:[%s954 + $0x138] sm:$0xff]
      %v982 = vld [vmem:[%s954 + $0x140] sm:$0xff]
      %v983 = vld [vmem:[%s954 + $0x150] sm:$0xff]
      %v984 = vld [vmem:[%s954 + $0x158] sm:$0xff]
      %v985 = vld [vmem:[%s954 + $0x168] sm:$0xff]
      %v986 = vld [vmem:[%s954 + $0x170] sm:$0xff]
      %v987 = vlaneseq
      %v988 = vshrl.u32 %v987, 7
      %v989 = vsub.s32 0, %v988
      %v990 = vrot.slane %v346, %v989
      %v991 = vmul.f32 %v955, %v990
      %v992 = vmul.f32 %v956, %v990
      %v993 = vmul.f32 %v957, %v990
      %v994 = vmul.f32 %v958, %v990
      %v995 = vmul.f32 %v959, %v990
      %v996 = vmul.f32 %v960, %v990
      %v997 = vmul.f32 %v961, %v990
      %v998 = vmul.f32 %v962, %v990
      %v999 = vmul.f32 %v963, %v990
      %v1000 = vmul.f32 %v964, %v990
      %v1001 = vmul.f32 %v965, %v990
      %v1002 = vmul.f32 %v966, %v990
      %v1003 = vmul.f32 %v967, %v990
      %v1004 = vmul.f32 %v968, %v990
      %v1005 = vmul.f32 %v969, %v990
      %v1006 = vmul.f32 %v970, %v990
      %v1007 = vmul.f32 %v971, %v990
      %v1008 = vmul.f32 %v972, %v990
      %v1009 = vmul.f32 %v973, %v990
      %v1010 = vmul.f32 %v974, %v990
      %v1011 = vmul.f32 %v975, %v990
      %v1012 = vmul.f32 %v976, %v990
      %v1013 = vmul.f32 %v977, %v990
      %v1014 = vmul.f32 %v978, %v990
      %v1015 = vmul.f32 %v979, %v990
      %v1016 = vmul.f32 %v980, %v990
      %v1017 = vmul.f32 %v981, %v990
      %v1018 = vmul.f32 %v982, %v990
      %v1019 = vmul.f32 %v983, %v990
      %v1020 = vmul.f32 %v984, %v990
      %v1021 = vmul.f32 %v985, %v990
      %v1022 = vmul.f32 %v986, %v990
      %v1023 = vadd.f32 %v922, %v991
      %v1024 = vadd.f32 %v923, %v992
      %v1025 = vadd.f32 %v924, %v993
      %v1026 = vadd.f32 %v925, %v994
      %v1027 = vadd.f32 %v926, %v995
      %v1028 = vadd.f32 %v927, %v996
      %v1029 = vadd.f32 %v928, %v997
      %v1030 = vadd.f32 %v929, %v998
      %v1031 = vadd.f32 %v930, %v999
      %v1032 = vadd.f32 %v931, %v1000
      %v1033 = vadd.f32 %v932, %v1001
      %v1034 = vadd.f32 %v933, %v1002
      %v1035 = vadd.f32 %v934, %v1003
      %v1036 = vadd.f32 %v935, %v1004
      %v1037 = vadd.f32 %v936, %v1005
      %v1038 = vadd.f32 %v937, %v1006
      %v1039 = vadd.f32 %v938, %v1007
      %v1040 = vadd.f32 %v939, %v1008
      %v1041 = vadd.f32 %v940, %v1009
      %v1042 = vadd.f32 %v941, %v1010
      %v1043 = vadd.f32 %v942, %v1011
      %v1044 = vadd.f32 %v943, %v1012
      %v1045 = vadd.f32 %v944, %v1013
      %v1046 = vadd.f32 %v945, %v1014
      %v1047 = vadd.f32 %v946, %v1015
      %v1048 = vadd.f32 %v947, %v1016
      %v1049 = vadd.f32 %v948, %v1017
      %v1050 = vadd.f32 %v949, %v1018
      %v1051 = vadd.f32 %v950, %v1019
      %v1052 = vadd.f32 %v951, %v1020
      %v1053 = vadd.f32 %v952, %v1021
      %v1054 = vadd.f32 %v953, %v1022
      %v1055 = vld [vmem:[%s954 + $0x1] sm:$0xff]
      %v1056 = vld [vmem:[%s954 + $0x9] sm:$0xff]
      %v1057 = vld [vmem:[%s954 + $0x19] sm:$0xff]
      %v1058 = vld [vmem:[%s954 + $0x21] sm:$0xff]
      %v1059 = vld [vmem:[%s954 + $0x31] sm:$0xff]
      %v1060 = vld [vmem:[%s954 + $0x39] sm:$0xff]
      %v1061 = vld [vmem:[%s954 + $0x49] sm:$0xff]
      %v1062 = vld [vmem:[%s954 + $0x51] sm:$0xff]
      %v1063 = vld [vmem:[%s954 + $0x61] sm:$0xff]
      %v1064 = vld [vmem:[%s954 + $0x69] sm:$0xff]
      %v1065 = vld [vmem:[%s954 + $0x79] sm:$0xff]
      %v1066 = vld [vmem:[%s954 + $0x81] sm:$0xff]
      %v1067 = vld [vmem:[%s954 + $0x91] sm:$0xff]
      %v1068 = vld [vmem:[%s954 + $0x99] sm:$0xff]
      %v1069 = vld [vmem:[%s954 + $0xa9] sm:$0xff]
      %v1070 = vld [vmem:[%s954 + $0xb1] sm:$0xff]
      %v1071 = vld [vmem:[%s954 + $0xc1] sm:$0xff]
      %v1072 = vld [vmem:[%s954 + $0xc9] sm:$0xff]
      %v1073 = vld [vmem:[%s954 + $0xd9] sm:$0xff]
      %v1074 = vld [vmem:[%s954 + $0xe1] sm:$0xff]
      %v1075 = vld [vmem:[%s954 + $0xf1] sm:$0xff]
      %v1076 = vld [vmem:[%s954 + $0xf9] sm:$0xff]
      %v1077 = vld [vmem:[%s954 + $0x109] sm:$0xff]
      %v1078 = vld [vmem:[%s954 + $0x111] sm:$0xff]
      %v1079 = vld [vmem:[%s954 + $0x121] sm:$0xff]
      %v1080 = vld [vmem:[%s954 + $0x129] sm:$0xff]
      %v1081 = vld [vmem:[%s954 + $0x139] sm:$0xff]
      %v1082 = vld [vmem:[%s954 + $0x141] sm:$0xff]
      %v1083 = vld [vmem:[%s954 + $0x151] sm:$0xff]
      %v1084 = vld [vmem:[%s954 + $0x159] sm:$0xff]
      %v1085 = vld [vmem:[%s954 + $0x169] sm:$0xff]
      %v1086 = vld [vmem:[%s954 + $0x171] sm:$0xff]
      %v1087 = vlaneseq
      %v1088 = vshrl.u32 %v1087, 7
      %v1089 = vsub.s32 1, %v1088
      %v1090 = vrot.slane %v346, %v1089
      %v1091 = vmul.f32 %v1055, %v1090
      %v1092 = vmul.f32 %v1056, %v1090
      %v1093 = vmul.f32 %v1057, %v1090
      %v1094 = vmul.f32 %v1058, %v1090
      %v1095 = vmul.f32 %v1059, %v1090
      %v1096 = vmul.f32 %v1060, %v1090
      %v1097 = vmul.f32 %v1061, %v1090
      %v1098 = vmul.f32 %v1062, %v1090
      %v1099 = vmul.f32 %v1063, %v1090
      %v1100 = vmul.f32 %v1064, %v1090
      %v1101 = vmul.f32 %v1065, %v1090
      %v1102 = vmul.f32 %v1066, %v1090
      %v1103 = vmul.f32 %v1067, %v1090
      %v1104 = vmul.f32 %v1068, %v1090
      %v1105 = vmul.f32 %v1069, %v1090
      %v1106 = vmul.f32 %v1070, %v1090
      %v1107 = vmul.f32 %v1071, %v1090
      %v1108 = vmul.f32 %v1072, %v1090
      %v1109 = vmul.f32 %v1073, %v1090
      %v1110 = vmul.f32 %v1074, %v1090
      %v1111 = vmul.f32 %v1075, %v1090
      %v1112 = vmul.f32 %v1076, %v1090
      %v1113 = vmul.f32 %v1077, %v1090
      %v1114 = vmul.f32 %v1078, %v1090
      %v1115 = vmul.f32 %v1079, %v1090
      %v1116 = vmul.f32 %v1080, %v1090
      %v1117 = vmul.f32 %v1081, %v1090
      %v1118 = vmul.f32 %v1082, %v1090
      %v1119 = vmul.f32 %v1083, %v1090
      %v1120 = vmul.f32 %v1084, %v1090
      %v1121 = vmul.f32 %v1085, %v1090
      %v1122 = vmul.f32 %v1086, %v1090
      %v1123 = vadd.f32 %v1023, %v1091
      %v1124 = vadd.f32 %v1024, %v1092
      %v1125 = vadd.f32 %v1025, %v1093
      %v1126 = vadd.f32 %v1026, %v1094
      %v1127 = vadd.f32 %v1027, %v1095
      %v1128 = vadd.f32 %v1028, %v1096
      %v1129 = vadd.f32 %v1029, %v1097
      %v1130 = vadd.f32 %v1030, %v1098
      %v1131 = vadd.f32 %v1031, %v1099
      %v1132 = vadd.f32 %v1032, %v1100
      %v1133 = vadd.f32 %v1033, %v1101
      %v1134 = vadd.f32 %v1034, %v1102
      %v1135 = vadd.f32 %v1035, %v1103
      %v1136 = vadd.f32 %v1036, %v1104
      %v1137 = vadd.f32 %v1037, %v1105
      %v1138 = vadd.f32 %v1038, %v1106
      %v1139 = vadd.f32 %v1039, %v1107
      %v1140 = vadd.f32 %v1040, %v1108
      %v1141 = vadd.f32 %v1041, %v1109
      %v1142 = vadd.f32 %v1042, %v1110
      %v1143 = vadd.f32 %v1043, %v1111
      %v1144 = vadd.f32 %v1044, %v1112
      %v1145 = vadd.f32 %v1045, %v1113
      %v1146 = vadd.f32 %v1046, %v1114
      %v1147 = vadd.f32 %v1047, %v1115
      %v1148 = vadd.f32 %v1048, %v1116
      %v1149 = vadd.f32 %v1049, %v1117
      %v1150 = vadd.f32 %v1050, %v1118
      %v1151 = vadd.f32 %v1051, %v1119
      %v1152 = vadd.f32 %v1052, %v1120
      %v1153 = vadd.f32 %v1053, %v1121
      %v1154 = vadd.f32 %v1054, %v1122
      %v1155 = vld [vmem:[%s954 + $0x2] sm:$0xff]
      %v1156 = vld [vmem:[%s954 + $0xa] sm:$0xff]
      %v1157 = vld [vmem:[%s954 + $0x1a] sm:$0xff]
      %v1158 = vld [vmem:[%s954 + $0x22] sm:$0xff]
      %v1159 = vld [vmem:[%s954 + $0x32] sm:$0xff]
      %v1160 = vld [vmem:[%s954 + $0x3a] sm:$0xff]
      %v1161 = vld [vmem:[%s954 + $0x4a] sm:$0xff]
      %v1162 = vld [vmem:[%s954 + $0x52] sm:$0xff]
      %v1163 = vld [vmem:[%s954 + $0x62] sm:$0xff]
      %v1164 = vld [vmem:[%s954 + $0x6a] sm:$0xff]
      %v1165 = vld [vmem:[%s954 + $0x7a] sm:$0xff]
      %v1166 = vld [vmem:[%s954 + $0x82] sm:$0xff]
      %v1167 = vld [vmem:[%s954 + $0x92] sm:$0xff]
      %v1168 = vld [vmem:[%s954 + $0x9a] sm:$0xff]
      %v1169 = vld [vmem:[%s954 + $0xaa] sm:$0xff]
      %v1170 = vld [vmem:[%s954 + $0xb2] sm:$0xff]
      %v1171 = vld [vmem:[%s954 + $0xc2] sm:$0xff]
      %v1172 = vld [vmem:[%s954 + $0xca] sm:$0xff]
      %v1173 = vld [vmem:[%s954 + $0xda] sm:$0xff]
      %v1174 = vld [vmem:[%s954 + $0xe2] sm:$0xff]
      %v1175 = vld [vmem:[%s954 + $0xf2] sm:$0xff]
      %v1176 = vld [vmem:[%s954 + $0xfa] sm:$0xff]
      %v1177 = vld [vmem:[%s954 + $0x10a] sm:$0xff]
      %v1178 = vld [vmem:[%s954 + $0x112] sm:$0xff]
      %v1179 = vld [vmem:[%s954 + $0x122] sm:$0xff]
      %v1180 = vld [vmem:[%s954 + $0x12a] sm:$0xff]
      %v1181 = vld [vmem:[%s954 + $0x13a] sm:$0xff]
      %v1182 = vld [vmem:[%s954 + $0x142] sm:$0xff]
      %v1183 = vld [vmem:[%s954 + $0x152] sm:$0xff]
      %v1184 = vld [vmem:[%s954 + $0x15a] sm:$0xff]
      %v1185 = vld [vmem:[%s954 + $0x16a] sm:$0xff]
      %v1186 = vld [vmem:[%s954 + $0x172] sm:$0xff]
      %v1187 = vlaneseq
      %v1188 = vshrl.u32 %v1187, 7
      %v1189 = vsub.s32 2, %v1188
      %v1190 = vrot.slane %v346, %v1189
      %v1191 = vmul.f32 %v1155, %v1190
      %v1192 = vmul.f32 %v1156, %v1190
      %v1193 = vmul.f32 %v1157, %v1190
      %v1194 = vmul.f32 %v1158, %v1190
      %v1195 = vmul.f32 %v1159, %v1190
      %v1196 = vmul.f32 %v1160, %v1190
      %v1197 = vmul.f32 %v1161, %v1190
      %v1198 = vmul.f32 %v1162, %v1190
      %v1199 = vmul.f32 %v1163, %v1190
      %v1200 = vmul.f32 %v1164, %v1190
      %v1201 = vmul.f32 %v1165, %v1190
      %v1202 = vmul.f32 %v1166, %v1190
      %v1203 = vmul.f32 %v1167, %v1190
      %v1204 = vmul.f32 %v1168, %v1190
      %v1205 = vmul.f32 %v1169, %v1190
      %v1206 = vmul.f32 %v1170, %v1190
      %v1207 = vmul.f32 %v1171, %v1190
      %v1208 = vmul.f32 %v1172, %v1190
      %v1209 = vmul.f32 %v1173, %v1190
      %v1210 = vmul.f32 %v1174, %v1190
      %v1211 = vmul.f32 %v1175, %v1190
      %v1212 = vmul.f32 %v1176, %v1190
      %v1213 = vmul.f32 %v1177, %v1190
      %v1214 = vmul.f32 %v1178, %v1190
      %v1215 = vmul.f32 %v1179, %v1190
      %v1216 = vmul.f32 %v1180, %v1190
      %v1217 = vmul.f32 %v1181, %v1190
      %v1218 = vmul.f32 %v1182, %v1190
      %v1219 = vmul.f32 %v1183, %v1190
      %v1220 = vmul.f32 %v1184, %v1190
      %v1221 = vmul.f32 %v1185, %v1190
      %v1222 = vmul.f32 %v1186, %v1190
      %v1223 = vadd.f32 %v1123, %v1191
      %v1224 = vadd.f32 %v1124, %v1192
      %v1225 = vadd.f32 %v1125, %v1193
      %v1226 = vadd.f32 %v1126, %v1194
      %v1227 = vadd.f32 %v1127, %v1195
      %v1228 = vadd.f32 %v1128, %v1196
      %v1229 = vadd.f32 %v1129, %v1197
      %v1230 = vadd.f32 %v1130, %v1198
      %v1231 = vadd.f32 %v1131, %v1199
      %v1232 = vadd.f32 %v1132, %v1200
      %v1233 = vadd.f32 %v1133, %v1201
      %v1234 = vadd.f32 %v1134, %v1202
      %v1235 = vadd.f32 %v1135, %v1203
      %v1236 = vadd.f32 %v1136, %v1204
      %v1237 = vadd.f32 %v1137, %v1205
      %v1238 = vadd.f32 %v1138, %v1206
      %v1239 = vadd.f32 %v1139, %v1207
      %v1240 = vadd.f32 %v1140, %v1208
      %v1241 = vadd.f32 %v1141, %v1209
      %v1242 = vadd.f32 %v1142, %v1210
      %v1243 = vadd.f32 %v1143, %v1211
      %v1244 = vadd.f32 %v1144, %v1212
      %v1245 = vadd.f32 %v1145, %v1213
      %v1246 = vadd.f32 %v1146, %v1214
      %v1247 = vadd.f32 %v1147, %v1215
      %v1248 = vadd.f32 %v1148, %v1216
      %v1249 = vadd.f32 %v1149, %v1217
      %v1250 = vadd.f32 %v1150, %v1218
      %v1251 = vadd.f32 %v1151, %v1219
      %v1252 = vadd.f32 %v1152, %v1220
      %v1253 = vadd.f32 %v1153, %v1221
      %v1254 = vadd.f32 %v1154, %v1222
      %v1255 = vmul.f32 %v1223, 0.5
      %v1256 = vmul.f32 %v1224, 0.5
      %v1257 = vmul.f32 %v1225, 0.5
      %v1258 = vmul.f32 %v1226, 0.5
      %v1259 = vmul.f32 %v1227, 0.5
      %v1260 = vmul.f32 %v1228, 0.5
      %v1261 = vmul.f32 %v1229, 0.5
      %v1262 = vmul.f32 %v1230, 0.5
      %v1263 = vmul.f32 %v1231, 0.5
      %v1264 = vmul.f32 %v1232, 0.5
      %v1265 = vmul.f32 %v1233, 0.5
      %v1266 = vmul.f32 %v1234, 0.5
      %v1267 = vmul.f32 %v1235, 0.5
      %v1268 = vmul.f32 %v1236, 0.5
      %v1269 = vmul.f32 %v1237, 0.5
      %v1270 = vmul.f32 %v1238, 0.5
      %v1271 = vmul.f32 %v1239, 0.5
      %v1272 = vmul.f32 %v1240, 0.5
      %v1273 = vmul.f32 %v1241, 0.5
      %v1274 = vmul.f32 %v1242, 0.5
      %v1275 = vmul.f32 %v1243, 0.5
      %v1276 = vmul.f32 %v1244, 0.5
      %v1277 = vmul.f32 %v1245, 0.5
      %v1278 = vmul.f32 %v1246, 0.5
      %v1279 = vmul.f32 %v1247, 0.5
      %v1280 = vmul.f32 %v1248, 0.5
      %v1281 = vmul.f32 %v1249, 0.5
      %v1282 = vmul.f32 %v1250, 0.5
      %v1283 = vmul.f32 %v1251, 0.5
      %v1284 = vmul.f32 %v1252, 0.5
      %v1285 = vmul.f32 %v1253, 0.5
      %v1286 = vmul.f32 %v1254, 0.5
      %v1287 = vmul.f32 %v1223, 0.70710677
      %v1288 = vmul.f32 %v1224, 0.70710677
      %v1289 = vmul.f32 %v1225, 0.70710677
      %v1290 = vmul.f32 %v1226, 0.70710677
      %v1291 = vmul.f32 %v1227, 0.70710677
      %v1292 = vmul.f32 %v1228, 0.70710677
      %v1293 = vmul.f32 %v1229, 0.70710677
      %v1294 = vmul.f32 %v1230, 0.70710677
      %v1295 = vmul.f32 %v1231, 0.70710677
      %v1296 = vmul.f32 %v1232, 0.70710677
      %v1297 = vmul.f32 %v1233, 0.70710677
      %v1298 = vmul.f32 %v1234, 0.70710677
      %v1299 = vmul.f32 %v1235, 0.70710677
      %v1300 = vmul.f32 %v1236, 0.70710677
      %v1301 = vmul.f32 %v1237, 0.70710677
      %v1302 = vmul.f32 %v1238, 0.70710677
      %v1303 = vmul.f32 %v1239, 0.70710677
      %v1304 = vmul.f32 %v1240, 0.70710677
      %v1305 = vmul.f32 %v1241, 0.70710677
      %v1306 = vmul.f32 %v1242, 0.70710677
      %v1307 = vmul.f32 %v1243, 0.70710677
      %v1308 = vmul.f32 %v1244, 0.70710677
      %v1309 = vmul.f32 %v1245, 0.70710677
      %v1310 = vmul.f32 %v1246, 0.70710677
      %v1311 = vmul.f32 %v1247, 0.70710677
      %v1312 = vmul.f32 %v1248, 0.70710677
      %v1313 = vmul.f32 %v1249, 0.70710677
      %v1314 = vmul.f32 %v1250, 0.70710677
      %v1315 = vmul.f32 %v1251, 0.70710677
      %v1316 = vmul.f32 %v1252, 0.70710677
      %v1317 = vmul.f32 %v1253, 0.70710677
      %v1318 = vmul.f32 %v1254, 0.70710677
      %v1319 = verf.f32.pop %v1287
      %v1320 = verf.f32.pop %v1288
      %v1321 = verf.f32.pop %v1289
      %v1322 = verf.f32.pop %v1290
      %v1323 = verf.f32.pop %v1291
      %v1324 = verf.f32.pop %v1292
      %v1325 = verf.f32.pop %v1293
      %v1326 = verf.f32.pop %v1294
      %v1327 = verf.f32.pop %v1295
      %v1328 = verf.f32.pop %v1296
      %v1329 = verf.f32.pop %v1297
      %v1330 = verf.f32.pop %v1298
      %v1331 = verf.f32.pop %v1299
      %v1332 = verf.f32.pop %v1300
      %v1333 = verf.f32.pop %v1301
      %v1334 = verf.f32.pop %v1302
      %v1335 = verf.f32.pop %v1303
      %v1336 = verf.f32.pop %v1304
      %v1337 = verf.f32.pop %v1305
      %v1338 = verf.f32.pop %v1306
      %v1339 = verf.f32.pop %v1307
      %v1340 = verf.f32.pop %v1308
      %v1341 = verf.f32.pop %v1309
      %v1342 = verf.f32.pop %v1310
      %v1343 = verf.f32.pop %v1311
      %v1344 = verf.f32.pop %v1312
      %v1345 = verf.f32.pop %v1313
      %v1346 = verf.f32.pop %v1314
      %v1347 = verf.f32.pop %v1315
      %v1348 = verf.f32.pop %v1316
      %v1349 = verf.f32.pop %v1317
      %v1350 = verf.f32.pop %v1318
      %v1351 = vadd.f32 %v1319, 1.0
      %v1352 = vadd.f32 %v1320, 1.0
      %v1353 = vadd.f32 %v1321, 1.0
      %v1354 = vadd.f32 %v1322, 1.0
      %v1355 = vadd.f32 %v1323, 1.0
      %v1356 = vadd.f32 %v1324, 1.0
      %v1357 = vadd.f32 %v1325, 1.0
      %v1358 = vadd.f32 %v1326, 1.0
      %v1359 = vadd.f32 %v1327, 1.0
      %v1360 = vadd.f32 %v1328, 1.0
      %v1361 = vadd.f32 %v1329, 1.0
      %v1362 = vadd.f32 %v1330, 1.0
      %v1363 = vadd.f32 %v1331, 1.0
      %v1364 = vadd.f32 %v1332, 1.0
      %v1365 = vadd.f32 %v1333, 1.0
      %v1366 = vadd.f32 %v1334, 1.0
      %v1367 = vadd.f32 %v1335, 1.0
      %v1368 = vadd.f32 %v1336, 1.0
      %v1369 = vadd.f32 %v1337, 1.0
      %v1370 = vadd.f32 %v1338, 1.0
      %v1371 = vadd.f32 %v1339, 1.0
      %v1372 = vadd.f32 %v1340, 1.0
      %v1373 = vadd.f32 %v1341, 1.0
      %v1374 = vadd.f32 %v1342, 1.0
      %v1375 = vadd.f32 %v1343, 1.0
      %v1376 = vadd.f32 %v1344, 1.0
      %v1377 = vadd.f32 %v1345, 1.0
      %v1378 = vadd.f32 %v1346, 1.0
      %v1379 = vadd.f32 %v1347, 1.0
      %v1380 = vadd.f32 %v1348, 1.0
      %v1381 = vadd.f32 %v1349, 1.0
      %v1382 = vadd.f32 %v1350, 1.0
      %v1383 = vmul.f32 %v1255, %v1351
      %v1384 = vmul.f32 %v1256, %v1352
      %v1385 = vmul.f32 %v1257, %v1353
      %v1386 = vmul.f32 %v1258, %v1354
      %v1387 = vmul.f32 %v1259, %v1355
      %v1388 = vmul.f32 %v1260, %v1356
      %v1389 = vmul.f32 %v1261, %v1357
      %v1390 = vmul.f32 %v1262, %v1358
      %v1391 = vmul.f32 %v1263, %v1359
      %v1392 = vmul.f32 %v1264, %v1360
      %v1393 = vmul.f32 %v1265, %v1361
      %v1394 = vmul.f32 %v1266, %v1362
      %v1395 = vmul.f32 %v1267, %v1363
      %v1396 = vmul.f32 %v1268, %v1364
      %v1397 = vmul.f32 %v1269, %v1365
      %v1398 = vmul.f32 %v1270, %v1366
      %v1399 = vmul.f32 %v1271, %v1367
      %v1400 = vmul.f32 %v1272, %v1368
      %v1401 = vmul.f32 %v1273, %v1369
      %v1402 = vmul.f32 %v1274, %v1370
      %v1403 = vmul.f32 %v1275, %v1371
      %v1404 = vmul.f32 %v1276, %v1372
      %v1405 = vmul.f32 %v1277, %v1373
      %v1406 = vmul.f32 %v1278, %v1374
      %v1407 = vmul.f32 %v1279, %v1375
      %v1408 = vmul.f32 %v1280, %v1376
      %v1409 = vmul.f32 %v1281, %v1377
      %v1410 = vmul.f32 %v1282, %v1378
      %v1411 = vmul.f32 %v1283, %v1379
      %v1412 = vmul.f32 %v1284, %v1380
      %v1413 = vmul.f32 %v1285, %v1381
      %v1414 = vmul.f32 %v1286, %v1382
      %v1415 = vadd.f32 %v1383, %v233
      %v1416 = vadd.f32 %v1384, %v234
      %v1417 = vadd.f32 %v1385, %v235
      %v1418 = vadd.f32 %v1386, %v236
      %v1419 = vadd.f32 %v1387, %v237
      %v1420 = vadd.f32 %v1388, %v238
      %v1421 = vadd.f32 %v1389, %v239
      %v1422 = vadd.f32 %v1390, %v240
      %v1423 = vadd.f32 %v1391, %v241
      %v1424 = vadd.f32 %v1392, %v242
      %v1425 = vadd.f32 %v1393, %v243
      %v1426 = vadd.f32 %v1394, %v244
      %v1427 = vadd.f32 %v1395, %v245
      %v1428 = vadd.f32 %v1396, %v246
      %v1429 = vadd.f32 %v1397, %v247
      %v1430 = vadd.f32 %v1398, %v248
      %v1431 = vadd.f32 %v1399, %v249
      %v1432 = vadd.f32 %v1400, %v250
      %v1433 = vadd.f32 %v1401, %v251
      %v1434 = vadd.f32 %v1402, %v252
      %v1435 = vadd.f32 %v1403, %v253
      %v1436 = vadd.f32 %v1404, %v254
      %v1437 = vadd.f32 %v1405, %v255
      %v1438 = vadd.f32 %v1406, %v256
      %v1439 = vadd.f32 %v1407, %v257
      %v1440 = vadd.f32 %v1408, %v258
      %v1441 = vadd.f32 %v1409, %v259
      %v1442 = vadd.f32 %v1410, %v260
      %v1443 = vadd.f32 %v1411, %v261
      %v1444 = vadd.f32 %v1412, %v262
      %v1445 = vadd.f32 %v1413, %v263
      %v1446 = vadd.f32 %v1414, %v264
      %1447 = vst.msk [vmem:[%s232] sm:$0xff] %vm265, %v1415
      %1448 = vst.msk [vmem:[%s232 + $0x8] sm:$0xff] %vm265, %v1416
      %1449 = vst.msk [vmem:[%s232 + $0x10] sm:$0xff] %vm265, %v1417
      %1450 = vst.msk [vmem:[%s232 + $0x18] sm:$0xff] %vm265, %v1418
      %1451 = vst.msk [vmem:[%s232 + $0x20] sm:$0xff] %vm265, %v1419
      %1452 = vst.msk [vmem:[%s232 + $0x28] sm:$0xff] %vm265, %v1420
      %1453 = vst.msk [vmem:[%s232 + $0x30] sm:$0xff] %vm265, %v1421
      %1454 = vst.msk [vmem:[%s232 + $0x38] sm:$0xff] %vm265, %v1422
      %1455 = vst.msk [vmem:[%s232 + $0x40] sm:$0xff] %vm265, %v1423
      %1456 = vst.msk [vmem:[%s232 + $0x48] sm:$0xff] %vm265, %v1424
      %1457 = vst.msk [vmem:[%s232 + $0x50] sm:$0xff] %vm265, %v1425
      %1458 = vst.msk [vmem:[%s232 + $0x58] sm:$0xff] %vm265, %v1426
      %1459 = vst.msk [vmem:[%s232 + $0x60] sm:$0xff] %vm265, %v1427
      %1460 = vst.msk [vmem:[%s232 + $0x68] sm:$0xff] %vm265, %v1428
      %1461 = vst.msk [vmem:[%s232 + $0x70] sm:$0xff] %vm265, %v1429
      %1462 = vst.msk [vmem:[%s232 + $0x78] sm:$0xff] %vm265, %v1430
      %1463 = vst.msk [vmem:[%s232 + $0x80] sm:$0xff] %vm265, %v1431
      %1464 = vst.msk [vmem:[%s232 + $0x88] sm:$0xff] %vm265, %v1432
      %1465 = vst.msk [vmem:[%s232 + $0x90] sm:$0xff] %vm265, %v1433
      %1466 = vst.msk [vmem:[%s232 + $0x98] sm:$0xff] %vm265, %v1434
      %1467 = vst.msk [vmem:[%s232 + $0xa0] sm:$0xff] %vm265, %v1435
      %1468 = vst.msk [vmem:[%s232 + $0xa8] sm:$0xff] %vm265, %v1436
      %1469 = vst.msk [vmem:[%s232 + $0xb0] sm:$0xff] %vm265, %v1437
      %1470 = vst.msk [vmem:[%s232 + $0xb8] sm:$0xff] %vm265, %v1438
      %1471 = vst.msk [vmem:[%s232 + $0xc0] sm:$0xff] %vm265, %v1439
      %1472 = vst.msk [vmem:[%s232 + $0xc8] sm:$0xff] %vm265, %v1440
      %1473 = vst.msk [vmem:[%s232 + $0xd0] sm:$0xff] %vm265, %v1441
      %1474 = vst.msk [vmem:[%s232 + $0xd8] sm:$0xff] %vm265, %v1442
      %1475 = vst.msk [vmem:[%s232 + $0xe0] sm:$0xff] %vm265, %v1443
      %1476 = vst.msk [vmem:[%s232 + $0xe8] sm:$0xff] %vm265, %v1444
      %1477 = vst.msk [vmem:[%s232 + $0xf0] sm:$0xff] %vm265, %v1445
      %1478 = vst.msk [vmem:[%s232 + $0xf8] sm:$0xff] %vm265, %v1446
      %p1479 = scmp.lt.s32.totalorder %s18, 1
      %s1480 = scalar_select %p1479, %s18, 1
      %p1481 = scmp.lt.s32.totalorder %s19, 0
      %s1482 = scalar_select %p1481, %s19, 0
      %s1483 = smul.addr %s1480, 32
      %s1484 = sadd.s32 %s1482, %s1483
      %s1485 = smul.addr %s1484, 8
      %s1486 = scalar_lea.vmem %s3, %s1485
      // Predicated region
      $region33: #{tpu_custom_call.1} parent=31 // pred_check
        %p1487 = pneg %p126
      $region34: #{tpu_custom_call.1} parent=31 // pred_check_branch
        %1489 = sbr.rel (%p1487) target = $region36
      $region35: #{tpu_custom_call.1} parent=31 // pred_region
        _
      $region36: #{tpu_custom_call.1} parent=31 // pred_fallthru
        _
    $region32: #{tpu_custom_call.1} parent=5 // pred_fallthru
      _
    %p1490 = scmp.le.s32.totalorder 2, %s9
    // Predicated region
    $region37: #{tpu_custom_call.1} parent=5 // pred_check
      %p1491 = pneg %p1490
    $region38: #{tpu_custom_call.1} parent=5 // pred_check_branch
      %1493 = sbr.rel (%p1491) target = $region40
    $region39: #{tpu_custom_call.1} parent=5 // pred_region
      %s1494 = ssub.s32 %s9, 2
      // Predicated region
      $region41: #{tpu_custom_call.1} parent=39 // pred_check
        %p1495 = pneg %p132
      $region42: #{tpu_custom_call.1} parent=39 // pred_check_branch
        %1497 = sbr.rel (%p1495) target = $region44
      $region43: #{tpu_custom_call.1} parent=39 // pred_region
        %p1498 = scmp.lt.s32.totalorder %s20, 1
        %s1499 = scalar_select %p1498, %s20, 1
        %p1500 = scmp.lt.s32.totalorder %s21, 0
        %s1501 = scalar_select %p1500, %s21, 0
        %s1502 = smul.addr %s1499, 32
        %s1503 = sadd.s32 %s1501, %s1502
        %s1504 = smul.addr %s1503, 8
        %s1505 = scalar_lea.vmem %s3, %s1504
      $region44: #{tpu_custom_call.1} parent=39 // pred_fallthru
        _
    $region40: #{tpu_custom_call.1} parent=5 // pred_fallthru
      _
  $region6: #{tpu_custom_call.1} parent=0 // loop_footer
    %s13 = sadd.s32 1, %s9
  $region7: #{tpu_custom_call.1} parent=0 // loop_footer_branch
    %8 = sbr.rel target = $region3
  $region8: #{tpu_custom_call.1} parent=0 // loop_exit
    _

</llo_original>
